<compile_context>
chip_gen: v6e
topology: v6e:2x2x1
jax: 0.10.0
libtpu: 0.0.40
codegen_flags: <defaults>
</compile_context>

<pallas_src>
import functools

import jax
import jax.numpy as jnp
from jax.experimental import pallas as pl
from jax.experimental.pallas import tpu as pltpu


# ----------------------------- Pallas kernel -------------------------------

def fused_net_kernel(x_ref, w1_ref, b1_ref, w2_ref, b2_ref, w3_ref, b3_ref,
                     wd1_ref, bd1_ref, wd2_ref, bd2_ref, out_ref, *, tb, n, l):
    """One grid step = `tb` batch elements.

    x_ref   : (tb*n*l, C) f32   channels-last slab (tb batch elems x n shapes x l points)
    w1_ref  : (C, c1)   f32     conv1 (kernel_size=1), MXU (K=3 padded, ~free)
    w2_ref  : (c1, c2)  cdt     conv2 (MXU)
    w3_ref  : (c2, c3)  cdt     conv3 (MXU)
    b*_ref  : (1, c*)   f32
    wd1_ref : (c3, 128) cdt     DeepSets equivariant layer 1 (MXU)
    bd1_ref : (1, 128)  f32
    wd2_ref : (1, 128)  f32     DeepSets layer-2 weight row (VPU mul + lane reduce)
    bd2_ref : (1, 1)    f32
    out_ref : (tb*n, 1) f32     log-probabilities over the set dimension
    """
    cdt = w2_ref.dtype                           # MXU compute dtype (f32 or bf16)
    x = x_ref[...]                               # (tb*n*l, C) f32

    # ---- conv block (BatchNorm identity-folded; ReLU/bias in f32) ----
    h = jnp.dot(x, w1_ref[...], preferred_element_type=jnp.float32)
    h = jnp.maximum(h + b1_ref[...], 0.0)                              # (M, c1)
    h = jnp.dot(h.astype(cdt), w2_ref[...], preferred_element_type=jnp.float32)
    h = jnp.maximum(h + b2_ref[...], 0.0)                              # (M, c2)
    h = jnp.dot(h.astype(cdt), w3_ref[...], preferred_element_type=jnp.float32)
    h = jnp.maximum(h + b3_ref[...], 0.0)                              # (M, c3)
    c3 = h.shape[-1]

    # ---- per-shape global max pool over l: one segmented reduction.
    # reshape splits the sublane dim by l (multiple of 8) -> layout preserving.
    feat = jnp.max(h.reshape(tb * n, l, c3), axis=1)                   # (tb*n, c3)

    # ---- DeepSets equivariant block (128 -> 128 -> 1), batched over the tile.
    # Per-batch group reductions over the n set rows use static contiguous
    # slices (tiny: tb*n rows); the 128x128 matmul runs once on the full slab.
    parts = []
    for b in range(tb):
        fb = feat[b * n:(b + 1) * n, :]                                # (n, c3)
        parts.append(fb - jnp.max(fb, axis=0, keepdims=True))
    centered = parts[0] if tb == 1 else jnp.concatenate(parts, axis=0)

    g = jnp.dot(centered.astype(cdt), wd1_ref[...],
                preferred_element_type=jnp.float32)
    g = jnp.maximum(g + bd1_ref[...], 0.0)                             # (tb*n, 128)

    wd2 = wd2_ref[...]                                                 # (1, 128)
    bd2 = bd2_ref[...]                                                 # (1, 1)
    out_parts = []
    for b in range(tb):
        gb = g[b * n:(b + 1) * n, :]                                   # (n, 128)
        # (n,128)@(128,1) replaced by VPU multiply + lane reduction (XLU)
        logits = jnp.sum((gb - jnp.max(gb, axis=0, keepdims=True)) * wd2,
                         axis=-1, keepdims=True) + bd2                 # (n, 1)
        # log_softmax over the set dimension (PyTorch dim=1)
        m = jnp.max(logits, axis=0, keepdims=True)
        z = logits - m
        lse = jnp.log(jnp.sum(jnp.exp(z), axis=0, keepdims=True))
        out_parts.append(z - lse)
    out = out_parts[0] if tb == 1 else jnp.concatenate(out_parts, axis=0)
    out_ref[...] = out.astype(out_ref.dtype)                           # (tb*n, 1)


# ------------------------------ JAX wrapper --------------------------------

def deep_symmetric_net_forward(x, params, *, compute_dtype=jnp.float32,
                               batch_tile=None, vmem_cap_bytes=48 * 1024 * 1024):
    """x: (B, N, 3, L) float32  ->  log-probabilities (B, N, 1) over dim 1.

    batch_tile: batch elements per grid step.  Default auto-picks 8 (v7x-safe,
    64 MiB VMEM) while keeping >= 2 grid steps so both TensorCores get work;
    on v5e/v6e pass 16-32 and a larger vmem_cap_bytes for bigger tiles.
    """
    (w1, b1, w2, b2, w3, b3, wd1, bd1, wd2, bd2) = params
    B, N, C, L = x.shape
    c1, c2, c3 = w1.shape[0], w2.shape[0], w3.shape[0]        # 64, 128*df, 128

    # ---- choose the batch tile ----
    if batch_tile is None:
        tb = 8
        if B >= 2:
            tb = min(tb, max(1, B // 2))     # keep >= 2 grid steps (megacore / v7x)
        tb = max(1, min(tb, B))
    else:
        tb = max(1, min(int(batch_tile), B))
    Bp = -(-B // tb) * tb                    # pad batch to a multiple of tb
    G = Bp // tb

    # ---- HBM-side layout plumbing (once): channels-last slabs of tb elements ----
    x_t = jnp.transpose(x, (0, 1, 3, 2)).reshape(B, N * L, C).astype(jnp.float32)
    if Bp != B:
        x_t = jnp.concatenate(
            [x_t, jnp.zeros((Bp - B, N * L, C), x_t.dtype)], axis=0)
    x_t = x_t.reshape(G, tb * N * L, C)

    cdt = compute_dtype
    w1t = jnp.transpose(w1).astype(jnp.float32)               # (C, c1)  f32 MXU layer
    b1r = jnp.transpose(b1).astype(jnp.float32)               # (1, c1)
    w2t = jnp.transpose(w2).astype(cdt)                       # (c1, c2)
    b2r = jnp.transpose(b2).astype(jnp.float32)               # (1, c2)
    w3t = jnp.transpose(w3).astype(cdt)                       # (c2, c3)
    b3r = jnp.transpose(b3).astype(jnp.float32)               # (1, c3)
    wd1c = wd1.astype(cdt)                                    # (c3, 128)
    bd1r = bd1.astype(jnp.float32)                            # (1, 128)
    wd2r = jnp.transpose(wd2).astype(jnp.float32)             # (1, 128)
    bd2r = bd2.astype(jnp.float32)                            # (1, 1)

    # ---- rough VMEM budget: double-buffered lane-padded x tiles (C=3 -> 128 lanes),
    # live f32 conv intermediates, double-buffered weights.  Capped v7x-safe.
    est = 2 * tb * N * L * 128 * 4
    est += tb * N * L * (c1 + c2 + 2 * c3) * 4
    est += 2 * 4 * (C * c1 + c1 * c2 + c2 * c3 + c3 * 128 + 6 * 128)
    vmem_limit = int(min(vmem_cap_bytes, max(32 * 1024 * 1024, 1.5 * est)))

    kernel = functools.partial(fused_net_kernel, tb=tb, n=N, l=L)

    out = pl.pallas_call(
        kernel,
        out_shape=jax.ShapeDtypeStruct((G, tb * N, 1), jnp.float32),
        grid_spec=pltpu.PrefetchScalarGridSpec(
            num_scalar_prefetch=0,
            grid=(G,),
            in_specs=[
                pl.BlockSpec((None, tb * N * L, C), lambda g: (g, 0, 0)),  # x slab per step
                pl.BlockSpec((C, c1), lambda g: (0, 0)),                   # resident weights
                pl.BlockSpec((1, c1), lambda g: (0, 0)),
                pl.BlockSpec((c1, c2), lambda g: (0, 0)),
                pl.BlockSpec((1, c2), lambda g: (0, 0)),
                pl.BlockSpec((c2, c3), lambda g: (0, 0)),
                pl.BlockSpec((1, c3), lambda g: (0, 0)),
                pl.BlockSpec((c3, 128), lambda g: (0, 0)),
                pl.BlockSpec((1, 128), lambda g: (0, 0)),
                pl.BlockSpec((1, 128), lambda g: (0, 0)),
                pl.BlockSpec((1, 1), lambda g: (0, 0)),
            ],
            out_specs=pl.BlockSpec((None, tb * N, 1), lambda g: (g, 0, 0)),
        ),
        compiler_params=pltpu.CompilerParams(
            dimension_semantics=("parallel",),   # independent steps; megacore / 2x TC on v7x
            vmem_limit_bytes=vmem_limit,
        ),
    )(x_t, w1t, b1r, w2t, b2r, w3t, b3r, wd1c, bd1r, wd2r, bd2r)

    return out.reshape(Bp, N, 1)[:B]


# --------------------- deterministic parameter creation --------------------

def init_params(key, dim_factor=1):
    chans = [3, 64, 128 * dim_factor, 128]        # DeepSymmetricConv1dBlock channels
    keys = jax.random.split(key, 5)

    def lin(k, fan_in, shape):
        return jax.random.normal(k, shape, jnp.float32) / jnp.sqrt(float(fan_in))

    # conv1d (kernel_size=1) weights stored as (C_out, C_in); biases as (C_out, 1)
    w1 = lin(keys[0], chans[0], (chans[1], chans[0]))
    b1 = jnp.zeros((chans[1], 1), jnp.float32)
    w2 = lin(keys[1], chans[1], (chans[2], chans[1]))
    b2 = jnp.zeros((chans[2], 1), jnp.float32)
    w3 = lin(keys[2], chans[2], (chans[3], chans[2]))
    b3 = jnp.zeros((chans[3], 1), jnp.float32)

    # DeepSetsBlock channels (128, 128, 1): weights (C_in, C_out), biases (1, C_out)
    wd1 = lin(keys[3], 128, (128, 128))
    bd1 = jnp.zeros((1, 128), jnp.float32)
    wd2 = lin(keys[4], 128, (128, 1))
    bd2 = jnp.zeros((1, 1), jnp.float32)

    return (w1, b1, w2, b2, w3, b3, wd1, bd1, wd2, bd2)


# ------------------------- pure-JAX reference model ------------------------

def reference_forward(x, params, *, compute_dtype=jnp.float32):
    """Pure-JAX reference with the same precision policy as the kernel
    (input + conv1 in f32; bf16 only as conv2/conv3/DeepSets MXU operands)."""
    (w1, b1, w2, b2, w3, b3, wd1, bd1, wd2, bd2) = params
    B, N, C, L = x.shape
    xs = jnp.transpose(x, (0, 1, 3, 2)).reshape(B * N * L, C).astype(jnp.float32)
    h = jax.nn.relu(xs @ jnp.transpose(w1) + jnp.transpose(b1))
    h = jax.nn.relu(
        jnp.dot(h.astype(compute_dtype), jnp.transpose(w2).astype(compute_dtype),
                preferred_element_type=jnp.float32) + jnp.transpose(b2))
    h = jax.nn.relu(
        jnp.dot(h.astype(compute_dtype), jnp.transpose(w3).astype(compute_dtype),
                preferred_element_type=jnp.float32) + jnp.transpose(b3))
    f = jnp.max(h.reshape(B, N, L, -1), axis=2)                      # (B, N, 128)
    pooled = jnp.max(f, axis=1, keepdims=True)
    g = jax.nn.relu(
        jnp.dot((f - pooled).astype(compute_dtype), wd1.astype(compute_dtype),
                preferred_element_type=jnp.float32) + bd1)
    pooled2 = jnp.max(g, axis=1, keepdims=True)
    logits = jnp.sum((g - pooled2) * jnp.transpose(wd2)[None].astype(jnp.float32),
                     axis=-1, keepdims=True) + bd2                   # (B, N, 1)
    return jax.nn.log_softmax(logits, axis=1)


# ----------------------------------- main -----------------------------------

if __name__ == "__main__":
    key = jax.random.PRNGKey(0)
    k_x, k_p = jax.random.split(key)

    N, C, L = 4, 3, 128
    params = init_params(k_p, dim_factor=1)

    # ---- config 1: B=2, f32, auto batch tile (tb=1, grid=2) ----
    x2 = jax.random.normal(k_x, (2, N, C, L), jnp.float32)
    out_f32 = jax.block_until_ready(
        deep_symmetric_net_forward(x2, params, compute_dtype=jnp.float32))
    assert out_f32.shape == (2, N, 1), out_f32.shape
    assert bool(jnp.all(jnp.isfinite(out_f32)))
    sums = jnp.sum(jnp.exp(out_f32[..., 0]), axis=1)   # log_softmax normalizes over N
    assert bool(jnp.allclose(sums, jnp.ones_like(sums), atol=1e-3)), sums
    ref_f32 = reference_forward(x2, params, compute_dtype=jnp.float32)
    assert bool(jnp.allclose(out_f32, ref_f32, atol=2e-2, rtol=2e-2)), \
        float(jnp.max(jnp.abs(out_f32 - ref_f32)))

    # ---- config 2: B=2, bf16 MXU operands (production default on v6e/v7x) ----
    out_bf16 = jax.block_until_ready(
        deep_symmetric_net_forward(x2, params, compute_dtype=jnp.bfloat16))
    ref_bf16 = reference_forward(x2, params, compute_dtype=jnp.bfloat16)
    assert out_bf16.shape == (2, N, 1), out_bf16.shape
    assert bool(jnp.all(jnp.isfinite(out_bf16)))
    assert bool(jnp.allclose(out_bf16, ref_bf16, atol=2e-2, rtol=2e-2)), \
        float(jnp.max(jnp.abs(out_bf16 - ref_bf16)))

    # ---- config 3: B=5 with batch_tile=4 (multi-element tiles + batch padding) ----
    k_x2, _ = jax.random.split(k_x)
    x5 = jax.random.normal(k_x2, (5, N, C, L), jnp.float32)
    out_t4 = jax.block_until_ready(
        deep_symmetric_net_forward(x5, params, compute_dtype=jnp.float32,
                                   batch_tile=4))
    ref_t4 = reference_forward(x5, params, compute_dtype=jnp.float32)
    assert out_t4.shape == (5, N, 1), out_t4.shape
    assert bool(jnp.all(jnp.isfinite(out_t4)))
    assert bool(jnp.allclose(out_t4, ref_t4, atol=2e-2, rtol=2e-2)), \
        float(jnp.max(jnp.abs(out_t4 - ref_t4)))

    print("KERNEL_OK")
</pallas_src>

<mosaic_0001>
module attributes {stable_mosaic.version = 11 : i64} {
  func.func @fused_net_kernel(%arg0: i32, %arg1: memref<1x512x3xf32, #tpu.memory_space<vmem>>, %arg2: memref<3x64xf32, #tpu.memory_space<vmem>>, %arg3: memref<1x64xf32, #tpu.memory_space<vmem>>, %arg4: memref<64x128xf32, #tpu.memory_space<vmem>>, %arg5: memref<1x128xf32, #tpu.memory_space<vmem>>, %arg6: memref<128x128xf32, #tpu.memory_space<vmem>>, %arg7: memref<1x128xf32, #tpu.memory_space<vmem>>, %arg8: memref<128x128xf32, #tpu.memory_space<vmem>>, %arg9: memref<1x128xf32, #tpu.memory_space<vmem>>, %arg10: memref<1x128xf32, #tpu.memory_space<vmem>>, %arg11: memref<1x1xf32, #tpu.memory_space<vmem>>, %arg12: memref<1x4x1xf32, #tpu.memory_space<vmem>>) attributes {dimension_semantics = [#tpu.dimension_semantics<parallel>], iteration_bounds = array<i64: 2>, scalar_prefetch = 0 : i64, scratch_operands = 0 : i64, tpu.core_type = #tpu.core_type<tc>, window_params = [{transform_indices = @transform_0, window_bounds = array<i64: 1, 512, 3>}, {pipeline_mode = #tpu.pipeline_mode<synchronous>, transform_indices = @transform_1, window_bounds = array<i64: 3, 64>}, {pipeline_mode = #tpu.pipeline_mode<synchronous>, transform_indices = @transform_2, window_bounds = array<i64: 1, 64>}, {pipeline_mode = #tpu.pipeline_mode<synchronous>, transform_indices = @transform_3, window_bounds = array<i64: 64, 128>}, {pipeline_mode = #tpu.pipeline_mode<synchronous>, transform_indices = @transform_4, window_bounds = array<i64: 1, 128>}, {pipeline_mode = #tpu.pipeline_mode<synchronous>, transform_indices = @transform_5, window_bounds = array<i64: 128, 128>}, {pipeline_mode = #tpu.pipeline_mode<synchronous>, transform_indices = @transform_6, window_bounds = array<i64: 1, 128>}, {pipeline_mode = #tpu.pipeline_mode<synchronous>, transform_indices = @transform_7, window_bounds = array<i64: 128, 128>}, {pipeline_mode = #tpu.pipeline_mode<synchronous>, transform_indices = @transform_8, window_bounds = array<i64: 1, 128>}, {pipeline_mode = #tpu.pipeline_mode<synchronous>, transform_indices = @transform_9, window_bounds = array<i64: 1, 128>}, {pipeline_mode = #tpu.pipeline_mode<synchronous>, transform_indices = @transform_10, window_bounds = array<i64: 1, 1>}, {transform_indices = @transform_11, window_bounds = array<i64: 1, 4, 1>}]} {
    %c0 = arith.constant 0 : index
    %c0_0 = arith.constant 0 : index
    %c0_1 = arith.constant 0 : index
    %0 = vector.load %arg1[%c0, %c0_0, %c0_1] : memref<1x512x3xf32, #tpu.memory_space<vmem>>, vector<1x512x3xf32>
    %1 = vector.shape_cast %0 : vector<1x512x3xf32> to vector<512x3xf32>
    %c0_2 = arith.constant 0 : index
    %c0_3 = arith.constant 0 : index
    %2 = vector.load %arg2[%c0_2, %c0_3] : memref<3x64xf32, #tpu.memory_space<vmem>>, vector<3x64xf32>
    %cst = arith.constant dense<0.000000e+00> : vector<512x64xf32>
    %3 = tpu.matmul %1, %2, %cst {dimension_numbers = #tpu.dot_dimension_numbers<[1], [0], [0], [1], [0, 0, 1, 1], [], []>} : vector<512x3xf32>, vector<3x64xf32>, vector<512x64xf32> -> vector<512x64xf32>
    %c0_4 = arith.constant 0 : index
    %c0_5 = arith.constant 0 : index
    %4 = vector.load %arg3[%c0_4, %c0_5] : memref<1x64xf32, #tpu.memory_space<vmem>>, vector<1x64xf32>
    %5 = vector.broadcast %4 : vector<1x64xf32> to vector<512x64xf32>
    %6 = arith.addf %3, %5 : vector<512x64xf32>
    %cst_6 = arith.constant 0.000000e+00 : f32
    %7 = vector.broadcast %cst_6 : f32 to vector<512x64xf32>
    %8 = arith.maximumf %6, %7 : vector<512x64xf32>
    %c0_7 = arith.constant 0 : index
    %c0_8 = arith.constant 0 : index
    %9 = vector.load %arg4[%c0_7, %c0_8] : memref<64x128xf32, #tpu.memory_space<vmem>>, vector<64x128xf32>
    %cst_9 = arith.constant dense<0.000000e+00> : vector<512x128xf32>
    %10 = tpu.matmul %8, %9, %cst_9 {dimension_numbers = #tpu.dot_dimension_numbers<[1], [0], [0], [1], [0, 0, 1, 1], [], []>} : vector<512x64xf32>, vector<64x128xf32>, vector<512x128xf32> -> vector<512x128xf32>
    %c0_10 = arith.constant 0 : index
    %c0_11 = arith.constant 0 : index
    %11 = vector.load %arg5[%c0_10, %c0_11] : memref<1x128xf32, #tpu.memory_space<vmem>>, vector<1x128xf32>
    %12 = vector.broadcast %11 : vector<1x128xf32> to vector<512x128xf32>
    %13 = arith.addf %10, %12 : vector<512x128xf32>
    %cst_12 = arith.constant 0.000000e+00 : f32
    %14 = vector.broadcast %cst_12 : f32 to vector<512x128xf32>
    %15 = arith.maximumf %13, %14 : vector<512x128xf32>
    %c0_13 = arith.constant 0 : index
    %c0_14 = arith.constant 0 : index
    %16 = vector.load %arg6[%c0_13, %c0_14] : memref<128x128xf32, #tpu.memory_space<vmem>>, vector<128x128xf32>
    %cst_15 = arith.constant dense<0.000000e+00> : vector<512x128xf32>
    %17 = tpu.matmul %15, %16, %cst_15 {dimension_numbers = #tpu.dot_dimension_numbers<[1], [0], [0], [1], [0, 0, 1, 1], [], []>} : vector<512x128xf32>, vector<128x128xf32>, vector<512x128xf32> -> vector<512x128xf32>
    %c0_16 = arith.constant 0 : index
    %c0_17 = arith.constant 0 : index
    %18 = vector.load %arg7[%c0_16, %c0_17] : memref<1x128xf32, #tpu.memory_space<vmem>>, vector<1x128xf32>
    %19 = vector.broadcast %18 : vector<1x128xf32> to vector<512x128xf32>
    %20 = arith.addf %17, %19 : vector<512x128xf32>
    %cst_18 = arith.constant 0.000000e+00 : f32
    %21 = vector.broadcast %cst_18 : f32 to vector<512x128xf32>
    %22 = arith.maximumf %20, %21 : vector<512x128xf32>
    %23 = vector.shape_cast %22 : vector<512x128xf32> to vector<4x128x128xf32>
    %cst_19 = arith.constant dense<0xFF800000> : vector<4x128xf32>
    %24 = vector.multi_reduction <maximumf>, %23, %cst_19 [1] : vector<4x128x128xf32> to vector<4x128xf32>
    %cst_20 = arith.constant dense<0xFF800000> : vector<128xf32>
    %25 = vector.multi_reduction <maximumf>, %24, %cst_20 [0] : vector<4x128xf32> to vector<128xf32>
    %26 = vector.shape_cast %25 : vector<128xf32> to vector<1x128xf32>
    %27 = vector.broadcast %26 : vector<1x128xf32> to vector<4x128xf32>
    %28 = arith.subf %24, %27 : vector<4x128xf32>
    %c0_21 = arith.constant 0 : index
    %c0_22 = arith.constant 0 : index
    %29 = vector.load %arg8[%c0_21, %c0_22] : memref<128x128xf32, #tpu.memory_space<vmem>>, vector<128x128xf32>
    %cst_23 = arith.constant dense<0.000000e+00> : vector<4x128xf32>
    %30 = tpu.matmul %28, %29, %cst_23 {dimension_numbers = #tpu.dot_dimension_numbers<[1], [0], [0], [1], [0, 0, 1, 1], [], []>} : vector<4x128xf32>, vector<128x128xf32>, vector<4x128xf32> -> vector<4x128xf32>
    %c0_24 = arith.constant 0 : index
    %c0_25 = arith.constant 0 : index
    %31 = vector.load %arg9[%c0_24, %c0_25] : memref<1x128xf32, #tpu.memory_space<vmem>>, vector<1x128xf32>
    %32 = vector.broadcast %31 : vector<1x128xf32> to vector<4x128xf32>
    %33 = arith.addf %30, %32 : vector<4x128xf32>
    %cst_26 = arith.constant 0.000000e+00 : f32
    %34 = vector.broadcast %cst_26 : f32 to vector<4x128xf32>
    %35 = arith.maximumf %33, %34 : vector<4x128xf32>
    %c0_27 = arith.constant 0 : index
    %c0_28 = arith.constant 0 : index
    %36 = vector.load %arg10[%c0_27, %c0_28] : memref<1x128xf32, #tpu.memory_space<vmem>>, vector<1x128xf32>
    %c0_29 = arith.constant 0 : index
    %c0_30 = arith.constant 0 : index
    %37 = vector.load %arg11[%c0_29, %c0_30] : memref<1x1xf32, #tpu.memory_space<vmem>>, vector<1x1xf32>
    %cst_31 = arith.constant dense<0xFF800000> : vector<128xf32>
    %38 = vector.multi_reduction <maximumf>, %35, %cst_31 [0] : vector<4x128xf32> to vector<128xf32>
    %39 = vector.shape_cast %38 : vector<128xf32> to vector<1x128xf32>
    %40 = vector.broadcast %39 : vector<1x128xf32> to vector<4x128xf32>
    %41 = arith.subf %35, %40 : vector<4x128xf32>
    %42 = vector.broadcast %36 : vector<1x128xf32> to vector<4x128xf32>
    %43 = arith.mulf %41, %42 : vector<4x128xf32>
    %cst_32 = arith.constant dense<0.000000e+00> : vector<4xf32>
    %44 = vector.multi_reduction <add>, %43, %cst_32 [1] : vector<4x128xf32> to vector<4xf32>
    %45 = vector.shape_cast %44 : vector<4xf32> to vector<4x1xf32>
    %46 = vector.broadcast %37 : vector<1x1xf32> to vector<4x1xf32>
    %47 = arith.addf %45, %46 : vector<4x1xf32>
    %cst_33 = arith.constant dense<0xFF800000> : vector<1xf32>
    %48 = vector.multi_reduction <maximumf>, %47, %cst_33 [0] : vector<4x1xf32> to vector<1xf32>
    %49 = vector.shape_cast %48 : vector<1xf32> to vector<1x1xf32>
    %50 = vector.broadcast %49 : vector<1x1xf32> to vector<4x1xf32>
    %51 = arith.subf %47, %50 : vector<4x1xf32>
    %52 = math.exp %51 : vector<4x1xf32>
    %cst_34 = arith.constant dense<0.000000e+00> : vector<1xf32>
    %53 = vector.multi_reduction <add>, %52, %cst_34 [0] : vector<4x1xf32> to vector<1xf32>
    %54 = vector.shape_cast %53 : vector<1xf32> to vector<1x1xf32>
    %55 = math.log %54 : vector<1x1xf32>
    %56 = vector.broadcast %55 : vector<1x1xf32> to vector<4x1xf32>
    %57 = arith.subf %51, %56 : vector<4x1xf32>
    %c0_35 = arith.constant 0 : index
    %c0_36 = arith.constant 0 : index
    %c0_37 = arith.constant 0 : index
    %58 = vector.load %arg12[%c0_35, %c0_36, %c0_37] : memref<1x4x1xf32, #tpu.memory_space<vmem>>, vector<1x4x1xf32>
    %59 = vector.shape_cast %58 : vector<1x4x1xf32> to vector<4x1xf32>
    %60 = vector.shape_cast %57 : vector<4x1xf32> to vector<1x4x1xf32>
    tpu.vector_store %arg12[%c0_35, %c0_36, %c0_37], %60 {strides = array<i32>} : memref<1x4x1xf32, #tpu.memory_space<vmem>>, vector<1x4x1xf32>,
    return
  }
  func.func @transform_0(%arg0: i32) -> (i32, i32, i32) {
    %c0_i32 = arith.constant 0 : i32
    %c0_i32_0 = arith.constant 0 : i32
    %c0_i32_1 = arith.constant 0 : i32
    return %arg0, %c0_i32, %c0_i32_0 : i32, i32, i32
  }
  func.func @transform_1(%arg0: i32) -> (i32, i32) {
    %c0_i32 = arith.constant 0 : i32
    %c0_i32_0 = arith.constant 0 : i32
    %c0_i32_1 = arith.constant 0 : i32
    return %c0_i32, %c0_i32_0 : i32, i32
  }
  func.func @transform_2(%arg0: i32) -> (i32, i32) {
    %c0_i32 = arith.constant 0 : i32
    %c0_i32_0 = arith.constant 0 : i32
    %c0_i32_1 = arith.constant 0 : i32
    return %c0_i32, %c0_i32_0 : i32, i32
  }
  func.func @transform_3(%arg0: i32) -> (i32, i32) {
    %c0_i32 = arith.constant 0 : i32
    %c0_i32_0 = arith.constant 0 : i32
    %c0_i32_1 = arith.constant 0 : i32
    return %c0_i32, %c0_i32_0 : i32, i32
  }
  func.func @transform_4(%arg0: i32) -> (i32, i32) {
    %c0_i32 = arith.constant 0 : i32
    %c0_i32_0 = arith.constant 0 : i32
    %c0_i32_1 = arith.constant 0 : i32
    return %c0_i32, %c0_i32_0 : i32, i32
  }
  func.func @transform_5(%arg0: i32) -> (i32, i32) {
    %c0_i32 = arith.constant 0 : i32
    %c0_i32_0 = arith.constant 0 : i32
    %c0_i32_1 = arith.constant 0 : i32
    return %c0_i32, %c0_i32_0 : i32, i32
  }
  func.func @transform_6(%arg0: i32) -> (i32, i32) {
    %c0_i32 = arith.constant 0 : i32
    %c0_i32_0 = arith.constant 0 : i32
    %c0_i32_1 = arith.constant 0 : i32
    return %c0_i32, %c0_i32_0 : i32, i32
  }
  func.func @transform_7(%arg0: i32) -> (i32, i32) {
    %c0_i32 = arith.constant 0 : i32
    %c0_i32_0 = arith.constant 0 : i32
    %c0_i32_1 = arith.constant 0 : i32
    return %c0_i32, %c0_i32_0 : i32, i32
  }
  func.func @transform_8(%arg0: i32) -> (i32, i32) {
    %c0_i32 = arith.constant 0 : i32
    %c0_i32_0 = arith.constant 0 : i32
    %c0_i32_1 = arith.constant 0 : i32
    return %c0_i32, %c0_i32_0 : i32, i32
  }
  func.func @transform_9(%arg0: i32) -> (i32, i32) {
    %c0_i32 = arith.constant 0 : i32
    %c0_i32_0 = arith.constant 0 : i32
    %c0_i32_1 = arith.constant 0 : i32
    return %c0_i32, %c0_i32_0 : i32, i32
  }
  func.func @transform_10(%arg0: i32) -> (i32, i32) {
    %c0_i32 = arith.constant 0 : i32
    %c0_i32_0 = arith.constant 0 : i32
    %c0_i32_1 = arith.constant 0 : i32
    return %c0_i32, %c0_i32_0 : i32, i32
  }
  func.func @transform_11(%arg0: i32) -> (i32, i32, i32) {
    %c0_i32 = arith.constant 0 : i32
    %c0_i32_0 = arith.constant 0 : i32
    %c0_i32_1 = arith.constant 0 : i32
    return %arg0, %c0_i32, %c0_i32_0 : i32, i32, i32
  }
}

</mosaic_0001>

<llo_original>
// kernel: tpu_custom_call.1
$region0: #{tpu_custom_call.1}
  #allocation0 [shape = 'u32[]', space=smem, size = 0x4, offset = 0x4, fixed_abs, tag = 'smem constant byte address 0x4 - core index']
  #allocation1 [shape = 'u32[144,128]{1,0:T(1,128)}', space=vmem, size = 0x12000, scoped, tag = 'internal scratch']
  #allocation2 [shape = 'f32[1,1]{1,0:T(1,128)S(1)}', space=vmem, size = 0x200, scoped, tag = 'scoped memory for tpu_custom_call.1']
  %s0 = inlined_call_operand.vmem [shape: f32[2,512,3], index: 0, kind: input, shape index: {}]
  %s1 = inlined_call_operand.vmem [shape: f32[3,64], index: 1, kind: input, shape index: {}]
  %s2 = inlined_call_operand.vmem [shape: f32[1,64], index: 2, kind: input, shape index: {}]
  %s3 = inlined_call_operand.vmem [shape: f32[64,128], index: 3, kind: input, shape index: {}]
  %s4 = inlined_call_operand.vmem [shape: f32[1,128], index: 4, kind: input, shape index: {}]
  %s5 = inlined_call_operand.vmem [shape: f32[128,128], index: 5, kind: input, shape index: {}]
  %s6 = inlined_call_operand.vmem [shape: f32[1,128], index: 6, kind: input, shape index: {}]
  %s7 = inlined_call_operand.vmem [shape: f32[128,128], index: 7, kind: input, shape index: {}]
  %s8 = inlined_call_operand.vmem [shape: f32[1,128], index: 8, kind: input, shape index: {}]
  %s9 = inlined_call_operand.vmem [shape: f32[1,128], index: 9, kind: input, shape index: {}]
  %s10 = inlined_call_operand.<no memory space> [shape: f32[1,1], index: 10, kind: input, shape index: {}]
  %s11 = inlined_call_operand.vmem [shape: f32[2,4,1], index: 11, kind: output, shape index: {}]
  %s12 = sld [smem:[#allocation0]]
  $region77: #{tpu_custom_call.1} parent=0
    _
  %s14 = ssub.s32 1, %s12
  %s15 = scalar_select 0, %s14, %s12
  %v16 = vstv %s10
  %17 = vst [vmem:[#allocation2] sm:$0x1] %v16
  loop: start=0, step=1, limit=4
  $region2: #{tpu_custom_call.1} parent=0 // loop_pre_header
    _
  $region3: #{tpu_custom_call.1} parent=0 // loop_header
    %s19 = sphi 0, %s23
    %p20 = scmp.ge.s32.totalorder %s19, 4
    %s29 = sphi 0, %s31
    %s32 = sphi 0, %s29
    %s33 = sphi 0, %s32
    %s49 = sphi 0, %s33
    %s53 = sphi 0, %s53
    %s55 = sphi 0, %s53
    %s56 = sphi 0, %s55
    %s70 = sphi 0, %s56
    %s74 = sphi 0, %s74
    %s76 = sphi 0, %s74
    %s77 = sphi 0, %s76
    %s91 = sphi 0, %s77
    %s95 = sphi 0, %s95
    %s97 = sphi 0, %s95
    %s98 = sphi 0, %s97
    %s112 = sphi 0, %s98
    %s116 = sphi 0, %s116
    %s118 = sphi 0, %s116
    %s119 = sphi 0, %s118
    %s133 = sphi 0, %s119
    %s137 = sphi 0, %s137
    %s139 = sphi 0, %s137
    %s140 = sphi 0, %s139
    %s154 = sphi 0, %s140
    %s158 = sphi 0, %s158
    %s160 = sphi 0, %s158
    %s161 = sphi 0, %s160
    %s175 = sphi 0, %s161
    %s179 = sphi 0, %s179
    %s181 = sphi 0, %s179
    %s182 = sphi 0, %s181
    %s196 = sphi 0, %s182
    %s200 = sphi 0, %s200
    %s202 = sphi 0, %s200
    %s203 = sphi 0, %s202
    %s217 = sphi 0, %s203
    %s221 = sphi 0, %s221
    %s223 = sphi 0, %s221
    %s224 = sphi 0, %s223
    %s238 = sphi 0, %s224
    %s242 = sphi 0, %s242
    %s244 = sphi 0, %s242
    %s245 = sphi 0, %s244
    %s259 = sphi 0, %s245
    %s265 = sphi 0, %s267
    %s268 = sphi 0, %s265
    %s269 = sphi 0, %s268
    %s285 = sphi 0, %s269
  $region4: #{tpu_custom_call.1} parent=0 // loop_header_branch
    %22 = sbr.rel (%p20) target = $region8
  $region5: #{tpu_custom_call.1} parent=0 // loop_body
    %s24 = ssub.s32 %s19, 1
    %s25 = ssub.s32 %s19, 2
    %s26 = sadd.s32 %s19, 1
    %s27 = ssub.s32 %s19, %s26
    %p28 = scmp.eq.s32.totalorder %s27, 0
    %s30 = sadd.s32 %s29, 1
    %s31 = scalar_select %p28, %s29, %s30
    %p34 = pneg %p28
    %p35 = scmp.eq.s32.totalorder %s19, 1
    %p36 = por %p34, %p35
    %p37 = scmp.ne.s32.totalorder %s29, %s32
    %p38 = scmp.eq.s32.totalorder %s19, 0
    %p39 = por %p37, %p38
    %p40 = scmp.ne.s32.totalorder %s29, %s32
    %p41 = scmp.eq.s32.totalorder %s24, 1
    %p42 = por %p40, %p41
    %p43 = scmp.ne.s32.totalorder %s32, %s33
    %p44 = scmp.eq.s32.totalorder %s24, 0
    %p45 = por %p43, %p44
    %p46 = scmp.ne.s32.totalorder %s32, %s33
    %p47 = scmp.eq.s32.totalorder %s25, 1
    %p48 = por %p46, %p47
    %p50 = scmp.ne.s32.totalorder %s33, %s49
    %p51 = scmp.eq.s32.totalorder %s25, 0
    %p52 = por %p50, %p51
    %s54 = sadd.s32 %s53, 1
    %p57 = scmp.eq.s32.totalorder %s19, 1
    %p58 = scmp.ne.s32.totalorder %s53, %s55
    %p59 = scmp.eq.s32.totalorder %s19, 0
    %p60 = por %p58, %p59
    %p61 = scmp.ne.s32.totalorder %s53, %s55
    %p62 = scmp.eq.s32.totalorder %s24, 1
    %p63 = por %p61, %p62
    %p64 = scmp.ne.s32.totalorder %s55, %s56
    %p65 = scmp.eq.s32.totalorder %s24, 0
    %p66 = por %p64, %p65
    %p67 = scmp.ne.s32.totalorder %s55, %s56
    %p68 = scmp.eq.s32.totalorder %s25, 1
    %p69 = por %p67, %p68
    %p71 = scmp.ne.s32.totalorder %s56, %s70
    %p72 = scmp.eq.s32.totalorder %s25, 0
    %p73 = por %p71, %p72
    %s75 = sadd.s32 %s74, 1
    %p78 = scmp.eq.s32.totalorder %s19, 1
    %p79 = scmp.ne.s32.totalorder %s74, %s76
    %p80 = scmp.eq.s32.totalorder %s19, 0
    %p81 = por %p79, %p80
    %p82 = scmp.ne.s32.totalorder %s74, %s76
    %p83 = scmp.eq.s32.totalorder %s24, 1
    %p84 = por %p82, %p83
    %p85 = scmp.ne.s32.totalorder %s76, %s77
    %p86 = scmp.eq.s32.totalorder %s24, 0
    %p87 = por %p85, %p86
    %p88 = scmp.ne.s32.totalorder %s76, %s77
    %p89 = scmp.eq.s32.totalorder %s25, 1
    %p90 = por %p88, %p89
    %p92 = scmp.ne.s32.totalorder %s77, %s91
    %p93 = scmp.eq.s32.totalorder %s25, 0
    %p94 = por %p92, %p93
    %s96 = sadd.s32 %s95, 1
    %p99 = scmp.eq.s32.totalorder %s19, 1
    %p100 = scmp.ne.s32.totalorder %s95, %s97
    %p101 = scmp.eq.s32.totalorder %s19, 0
    %p102 = por %p100, %p101
    %p103 = scmp.ne.s32.totalorder %s95, %s97
    %p104 = scmp.eq.s32.totalorder %s24, 1
    %p105 = por %p103, %p104
    %p106 = scmp.ne.s32.totalorder %s97, %s98
    %p107 = scmp.eq.s32.totalorder %s24, 0
    %p108 = por %p106, %p107
    %p109 = scmp.ne.s32.totalorder %s97, %s98
    %p110 = scmp.eq.s32.totalorder %s25, 1
    %p111 = por %p109, %p110
    %p113 = scmp.ne.s32.totalorder %s98, %s112
    %p114 = scmp.eq.s32.totalorder %s25, 0
    %p115 = por %p113, %p114
    %s117 = sadd.s32 %s116, 1
    %p120 = scmp.eq.s32.totalorder %s19, 1
    %p121 = scmp.ne.s32.totalorder %s116, %s118
    %p122 = scmp.eq.s32.totalorder %s19, 0
    %p123 = por %p121, %p122
    %p124 = scmp.ne.s32.totalorder %s116, %s118
    %p125 = scmp.eq.s32.totalorder %s24, 1
    %p126 = por %p124, %p125
    %p127 = scmp.ne.s32.totalorder %s118, %s119
    %p128 = scmp.eq.s32.totalorder %s24, 0
    %p129 = por %p127, %p128
    %p130 = scmp.ne.s32.totalorder %s118, %s119
    %p131 = scmp.eq.s32.totalorder %s25, 1
    %p132 = por %p130, %p131
    %p134 = scmp.ne.s32.totalorder %s119, %s133
    %p135 = scmp.eq.s32.totalorder %s25, 0
    %p136 = por %p134, %p135
    %s138 = sadd.s32 %s137, 1
    %p141 = scmp.eq.s32.totalorder %s19, 1
    %p142 = scmp.ne.s32.totalorder %s137, %s139
    %p143 = scmp.eq.s32.totalorder %s19, 0
    %p144 = por %p142, %p143
    %p145 = scmp.ne.s32.totalorder %s137, %s139
    %p146 = scmp.eq.s32.totalorder %s24, 1
    %p147 = por %p145, %p146
    %p148 = scmp.ne.s32.totalorder %s139, %s140
    %p149 = scmp.eq.s32.totalorder %s24, 0
    %p150 = por %p148, %p149
    %p151 = scmp.ne.s32.totalorder %s139, %s140
    %p152 = scmp.eq.s32.totalorder %s25, 1
    %p153 = por %p151, %p152
    %p155 = scmp.ne.s32.totalorder %s140, %s154
    %p156 = scmp.eq.s32.totalorder %s25, 0
    %p157 = por %p155, %p156
    %s159 = sadd.s32 %s158, 1
    %p162 = scmp.eq.s32.totalorder %s19, 1
    %p163 = scmp.ne.s32.totalorder %s158, %s160
    %p164 = scmp.eq.s32.totalorder %s19, 0
    %p165 = por %p163, %p164
    %p166 = scmp.ne.s32.totalorder %s158, %s160
    %p167 = scmp.eq.s32.totalorder %s24, 1
    %p168 = por %p166, %p167
    %p169 = scmp.ne.s32.totalorder %s160, %s161
    %p170 = scmp.eq.s32.totalorder %s24, 0
    %p171 = por %p169, %p170
    %p172 = scmp.ne.s32.totalorder %s160, %s161
    %p173 = scmp.eq.s32.totalorder %s25, 1
    %p174 = por %p172, %p173
    %p176 = scmp.ne.s32.totalorder %s161, %s175
    %p177 = scmp.eq.s32.totalorder %s25, 0
    %p178 = por %p176, %p177
    %s180 = sadd.s32 %s179, 1
    %p183 = scmp.eq.s32.totalorder %s19, 1
    %p184 = scmp.ne.s32.totalorder %s179, %s181
    %p185 = scmp.eq.s32.totalorder %s19, 0
    %p186 = por %p184, %p185
    %p187 = scmp.ne.s32.totalorder %s179, %s181
    %p188 = scmp.eq.s32.totalorder %s24, 1
    %p189 = por %p187, %p188
    %p190 = scmp.ne.s32.totalorder %s181, %s182
    %p191 = scmp.eq.s32.totalorder %s24, 0
    %p192 = por %p190, %p191
    %p193 = scmp.ne.s32.totalorder %s181, %s182
    %p194 = scmp.eq.s32.totalorder %s25, 1
    %p195 = por %p193, %p194
    %p197 = scmp.ne.s32.totalorder %s182, %s196
    %p198 = scmp.eq.s32.totalorder %s25, 0
    %p199 = por %p197, %p198
    %s201 = sadd.s32 %s200, 1
    %p204 = scmp.eq.s32.totalorder %s19, 1
    %p205 = scmp.ne.s32.totalorder %s200, %s202
    %p206 = scmp.eq.s32.totalorder %s19, 0
    %p207 = por %p205, %p206
    %p208 = scmp.ne.s32.totalorder %s200, %s202
    %p209 = scmp.eq.s32.totalorder %s24, 1
    %p210 = por %p208, %p209
    %p211 = scmp.ne.s32.totalorder %s202, %s203
    %p212 = scmp.eq.s32.totalorder %s24, 0
    %p213 = por %p211, %p212
    %p214 = scmp.ne.s32.totalorder %s202, %s203
    %p215 = scmp.eq.s32.totalorder %s25, 1
    %p216 = por %p214, %p215
    %p218 = scmp.ne.s32.totalorder %s203, %s217
    %p219 = scmp.eq.s32.totalorder %s25, 0
    %p220 = por %p218, %p219
    %s222 = sadd.s32 %s221, 1
    %p225 = scmp.eq.s32.totalorder %s19, 1
    %p226 = scmp.ne.s32.totalorder %s221, %s223
    %p227 = scmp.eq.s32.totalorder %s19, 0
    %p228 = por %p226, %p227
    %p229 = scmp.ne.s32.totalorder %s221, %s223
    %p230 = scmp.eq.s32.totalorder %s24, 1
    %p231 = por %p229, %p230
    %p232 = scmp.ne.s32.totalorder %s223, %s224
    %p233 = scmp.eq.s32.totalorder %s24, 0
    %p234 = por %p232, %p233
    %p235 = scmp.ne.s32.totalorder %s223, %s224
    %p236 = scmp.eq.s32.totalorder %s25, 1
    %p237 = por %p235, %p236
    %p239 = scmp.ne.s32.totalorder %s224, %s238
    %p240 = scmp.eq.s32.totalorder %s25, 0
    %p241 = por %p239, %p240
    %s243 = sadd.s32 %s242, 1
    %p246 = scmp.eq.s32.totalorder %s19, 1
    %p247 = scmp.ne.s32.totalorder %s242, %s244
    %p248 = scmp.eq.s32.totalorder %s19, 0
    %p249 = por %p247, %p248
    %p250 = scmp.ne.s32.totalorder %s242, %s244
    %p251 = scmp.eq.s32.totalorder %s24, 1
    %p252 = por %p250, %p251
    %p253 = scmp.ne.s32.totalorder %s244, %s245
    %p254 = scmp.eq.s32.totalorder %s24, 0
    %p255 = por %p253, %p254
    %p256 = scmp.ne.s32.totalorder %s244, %s245
    %p257 = scmp.eq.s32.totalorder %s25, 1
    %p258 = por %p256, %p257
    %p260 = scmp.ne.s32.totalorder %s245, %s259
    %p261 = scmp.eq.s32.totalorder %s25, 0
    %p262 = por %p260, %p261
    %s263 = ssub.s32 %s19, %s26
    %p264 = scmp.eq.s32.totalorder %s263, 0
    %s266 = sadd.s32 %s265, 1
    %s267 = scalar_select %p264, %s265, %s266
    %p270 = pneg %p264
    %p271 = scmp.eq.s32.totalorder %s19, 1
    %p272 = por %p270, %p271
    %p273 = scmp.ne.s32.totalorder %s265, %s268
    %p274 = scmp.eq.s32.totalorder %s19, 0
    %p275 = por %p273, %p274
    %p276 = scmp.ne.s32.totalorder %s265, %s268
    %p277 = scmp.eq.s32.totalorder %s24, 1
    %p278 = por %p276, %p277
    %p279 = scmp.ne.s32.totalorder %s268, %s269
    %p280 = scmp.eq.s32.totalorder %s24, 0
    %p281 = por %p279, %p280
    %p282 = scmp.ne.s32.totalorder %s268, %s269
    %p283 = scmp.eq.s32.totalorder %s25, 1
    %p284 = por %p282, %p283
    %p286 = scmp.ne.s32.totalorder %s269, %s285
    %p287 = scmp.eq.s32.totalorder %s25, 0
    %p288 = por %p286, %p287
    %p289 = scmp.le.s32.totalorder 1, %s19
    %p290 = scmp.lt.s32.totalorder %s19, 3
    %p291 = pnand %p289, %p290
    %p292 = pneg %p291
    // Predicated region
    $region9: #{tpu_custom_call.1} parent=5 // pred_check
      _
    $region10: #{tpu_custom_call.1} parent=5 // pred_check_branch
      %294 = sbr.rel (%p291) target = $region12
    $region11: #{tpu_custom_call.1} parent=5 // pred_region
      %s295 = ssub.s32 %s19, 1
      // Predicated region
      $region13: #{tpu_custom_call.1} parent=11 // pred_check
        %p296 = pneg %p66
      $region14: #{tpu_custom_call.1} parent=11 // pred_check_branch
        %298 = sbr.rel (%p296) target = $region16
      $region15: #{tpu_custom_call.1} parent=11 // pred_region
        _
      $region16: #{tpu_custom_call.1} parent=11 // pred_fallthru
        _
      // Predicated region
      $region17: #{tpu_custom_call.1} parent=11 // pred_check
        %p299 = pneg %p87
      $region18: #{tpu_custom_call.1} parent=11 // pred_check_branch
        %301 = sbr.rel (%p299) target = $region20
      $region19: #{tpu_custom_call.1} parent=11 // pred_region
        _
      $region20: #{tpu_custom_call.1} parent=11 // pred_fallthru
        _
      // Predicated region
      $region21: #{tpu_custom_call.1} parent=11 // pred_check
        %p302 = pneg %p108
      $region22: #{tpu_custom_call.1} parent=11 // pred_check_branch
        %304 = sbr.rel (%p302) target = $region24
      $region23: #{tpu_custom_call.1} parent=11 // pred_region
        _
      $region24: #{tpu_custom_call.1} parent=11 // pred_fallthru
        _
      // Predicated region
      $region25: #{tpu_custom_call.1} parent=11 // pred_check
        %p305 = pneg %p129
      $region26: #{tpu_custom_call.1} parent=11 // pred_check_branch
        %307 = sbr.rel (%p305) target = $region28
      $region27: #{tpu_custom_call.1} parent=11 // pred_region
        _
      $region28: #{tpu_custom_call.1} parent=11 // pred_fallthru
        _
      // Predicated region
      $region29: #{tpu_custom_call.1} parent=11 // pred_check
        %p308 = pneg %p150
      $region30: #{tpu_custom_call.1} parent=11 // pred_check_branch
        %310 = sbr.rel (%p308) target = $region32
      $region31: #{tpu_custom_call.1} parent=11 // pred_region
        _
      $region32: #{tpu_custom_call.1} parent=11 // pred_fallthru
        _
      // Predicated region
      $region33: #{tpu_custom_call.1} parent=11 // pred_check
        %p311 = pneg %p171
      $region34: #{tpu_custom_call.1} parent=11 // pred_check_branch
        %313 = sbr.rel (%p311) target = $region36
      $region35: #{tpu_custom_call.1} parent=11 // pred_region
        _
      $region36: #{tpu_custom_call.1} parent=11 // pred_fallthru
        _
      // Predicated region
      $region37: #{tpu_custom_call.1} parent=11 // pred_check
        %p314 = pneg %p192
      $region38: #{tpu_custom_call.1} parent=11 // pred_check_branch
        %316 = sbr.rel (%p314) target = $region40
      $region39: #{tpu_custom_call.1} parent=11 // pred_region
        _
      $region40: #{tpu_custom_call.1} parent=11 // pred_fallthru
        _
      // Predicated region
      $region41: #{tpu_custom_call.1} parent=11 // pred_check
        %p317 = pneg %p213
      $region42: #{tpu_custom_call.1} parent=11 // pred_check_branch
        %319 = sbr.rel (%p317) target = $region44
      $region43: #{tpu_custom_call.1} parent=11 // pred_region
        _
      $region44: #{tpu_custom_call.1} parent=11 // pred_fallthru
        _
      // Predicated region
      $region45: #{tpu_custom_call.1} parent=11 // pred_check
        %p320 = pneg %p234
      $region46: #{tpu_custom_call.1} parent=11 // pred_check_branch
        %322 = sbr.rel (%p320) target = $region48
      $region47: #{tpu_custom_call.1} parent=11 // pred_region
        _
      $region48: #{tpu_custom_call.1} parent=11 // pred_fallthru
        _
      // Predicated region
      $region49: #{tpu_custom_call.1} parent=11 // pred_check
        %p323 = pneg %p255
      $region50: #{tpu_custom_call.1} parent=11 // pred_check_branch
        %325 = sbr.rel (%p323) target = $region52
      $region51: #{tpu_custom_call.1} parent=11 // pred_region
        _
      $region52: #{tpu_custom_call.1} parent=11 // pred_fallthru
        _
    $region12: #{tpu_custom_call.1} parent=5 // pred_fallthru
      _
    %p326 = scmp.lt.s32.totalorder %s19, 2
    // Predicated region
    $region53: #{tpu_custom_call.1} parent=5 // pred_check
      %p327 = pneg %p326
    $region54: #{tpu_custom_call.1} parent=5 // pred_check_branch
      %329 = sbr.rel (%p327) target = $region56
    $region55: #{tpu_custom_call.1} parent=5 // pred_region
      // Predicated region
      $region57: #{tpu_custom_call.1} parent=55 // pred_check
        %p330 = pneg %p39
      $region58: #{tpu_custom_call.1} parent=55 // pred_check_branch
        %332 = sbr.rel (%p330) target = $region60
      $region59: #{tpu_custom_call.1} parent=55 // pred_region
        %p333 = scmp.lt.s32.totalorder %s19, 1
        %s334 = scalar_select %p333, %s19, 1
        %s335 = smul.addr %s334, 64
        %s336 = smul.addr %s335, 8
        %s337 = scalar_lea.vmem %s0, %s336
      $region60: #{tpu_custom_call.1} parent=55 // pred_fallthru
        _
    $region56: #{tpu_custom_call.1} parent=5 // pred_fallthru
      _
    %p338 = scmp.le.s32.totalorder 1, %s19
    %p339 = scmp.lt.s32.totalorder %s19, 3
    %p340 = pnand %p338, %p339
    %p341 = pneg %p340
    // Predicated region
    $region61: #{tpu_custom_call.1} parent=5 // pred_check
      _
    $region62: #{tpu_custom_call.1} parent=5 // pred_check_branch
      %343 = sbr.rel (%p340) target = $region64
    $region63: #{tpu_custom_call.1} parent=5 // pred_region
      %s344 = ssub.s32 %s19, 1
      %p345 = scmp.lt.s32.totalorder %s24, 1
      %s346 = scalar_select %p345, %s24, 1
      %s347 = smul.addr %s346, 64
      %s348 = smul.addr %s347, 8
      %s349 = scalar_lea.vmem %s0, %s348
      %p350 = pneg %p45
      %p351 = pneg %p42
      %p352 = pneg %p66
      %p353 = pneg %p63
      %p354 = pneg %p87
      %p355 = pneg %p84
      %p356 = pneg %p108
      %p357 = pneg %p105
      %p358 = pneg %p129
      %p359 = pneg %p126
      %p360 = pneg %p150
      %p361 = pneg %p147
      %p362 = pneg %p171
      %p363 = pneg %p168
      %p364 = pneg %p192
      %p365 = pneg %p189
      %p366 = pneg %p213
      %p367 = pneg %p210
      %p368 = pneg %p234
      %p369 = pneg %p231
      %p370 = pneg %p255
      %p371 = pneg %p252
      %p372 = pneg %p281
      %p373 = pneg %p278
      %p374 = scmp.lt.s32.totalorder %s24, 1
      %s375 = scalar_select %p374, %s24, 1
      %s376 = smul.addr %s375, 4
      %s377 = scalar_lea.vmem %s11, %s376
      %p378 = scmp.lt.s32.totalorder %s24, 1
      %s379 = scalar_select %p378, %s24, 1
      %s380 = smul.addr %s379, 64
      %s381 = smul.addr %s380, 8
      %s382 = scalar_lea.vmem %s0, %s381
      %p383 = scmp.lt.s32.totalorder %s24, 1
      %s384 = scalar_select %p383, %s24, 1
      %s385 = smul.addr %s384, 4
      %s386 = scalar_lea.vmem %s11, %s385
      %v387 = vld [vmem:[%s382] sm:$0xff]
      %v388 = vld [vmem:[%s382 + $0x8] sm:$0xff]
      %v389 = vld [vmem:[%s382 + $0x10] sm:$0xff]
      %v390 = vld [vmem:[%s382 + $0x18] sm:$0xff]
      %v391 = vld [vmem:[%s382 + $0x20] sm:$0xff]
      %v392 = vld [vmem:[%s382 + $0x28] sm:$0xff]
      %v393 = vld [vmem:[%s382 + $0x30] sm:$0xff]
      %v394 = vld [vmem:[%s382 + $0x38] sm:$0xff]
      %v395 = vld [vmem:[%s382 + $0x40] sm:$0xff]
      %v396 = vld [vmem:[%s382 + $0x48] sm:$0xff]
      %v397 = vld [vmem:[%s382 + $0x50] sm:$0xff]
      %v398 = vld [vmem:[%s382 + $0x58] sm:$0xff]
      %v399 = vld [vmem:[%s382 + $0x60] sm:$0xff]
      %v400 = vld [vmem:[%s382 + $0x68] sm:$0xff]
      %v401 = vld [vmem:[%s382 + $0x70] sm:$0xff]
      %v402 = vld [vmem:[%s382 + $0x78] sm:$0xff]
      %v403 = vld [vmem:[%s382 + $0x80] sm:$0xff]
      %v404 = vld [vmem:[%s382 + $0x88] sm:$0xff]
      %v405 = vld [vmem:[%s382 + $0x90] sm:$0xff]
      %v406 = vld [vmem:[%s382 + $0x98] sm:$0xff]
      %v407 = vld [vmem:[%s382 + $0xa0] sm:$0xff]
      %v408 = vld [vmem:[%s382 + $0xa8] sm:$0xff]
      %v409 = vld [vmem:[%s382 + $0xb0] sm:$0xff]
      %v410 = vld [vmem:[%s382 + $0xb8] sm:$0xff]
      %v411 = vld [vmem:[%s382 + $0xc0] sm:$0xff]
      %v412 = vld [vmem:[%s382 + $0xc8] sm:$0xff]
      %v413 = vld [vmem:[%s382 + $0xd0] sm:$0xff]
      %v414 = vld [vmem:[%s382 + $0xd8] sm:$0xff]
      %v415 = vld [vmem:[%s382 + $0xe0] sm:$0xff]
      %v416 = vld [vmem:[%s382 + $0xe8] sm:$0xff]
      %v417 = vld [vmem:[%s382 + $0xf0] sm:$0xff]
      %v418 = vld [vmem:[%s382 + $0xf8] sm:$0xff]
      %v419 = vld [vmem:[%s382 + $0x100] sm:$0xff]
      %v420 = vld [vmem:[%s382 + $0x108] sm:$0xff]
      %v421 = vld [vmem:[%s382 + $0x110] sm:$0xff]
      %v422 = vld [vmem:[%s382 + $0x118] sm:$0xff]
      %v423 = vld [vmem:[%s382 + $0x120] sm:$0xff]
      %v424 = vld [vmem:[%s382 + $0x128] sm:$0xff]
      %v425 = vld [vmem:[%s382 + $0x130] sm:$0xff]
      %v426 = vld [vmem:[%s382 + $0x138] sm:$0xff]
      %v427 = vld [vmem:[%s382 + $0x140] sm:$0xff]
      %v428 = vld [vmem:[%s382 + $0x148] sm:$0xff]
      %v429 = vld [vmem:[%s382 + $0x150] sm:$0xff]
      %v430 = vld [vmem:[%s382 + $0x158] sm:$0xff]
      %v431 = vld [vmem:[%s382 + $0x160] sm:$0xff]
      %v432 = vld [vmem:[%s382 + $0x168] sm:$0xff]
      %v433 = vld [vmem:[%s382 + $0x170] sm:$0xff]
      %v434 = vld [vmem:[%s382 + $0x178] sm:$0xff]
      %v435 = vld [vmem:[%s382 + $0x180] sm:$0xff]
      %v436 = vld [vmem:[%s382 + $0x188] sm:$0xff]
      %v437 = vld [vmem:[%s382 + $0x190] sm:$0xff]
      %v438 = vld [vmem:[%s382 + $0x198] sm:$0xff]
      %v439 = vld [vmem:[%s382 + $0x1a0] sm:$0xff]
      %v440 = vld [vmem:[%s382 + $0x1a8] sm:$0xff]
      %v441 = vld [vmem:[%s382 + $0x1b0] sm:$0xff]
      %v442 = vld [vmem:[%s382 + $0x1b8] sm:$0xff]
      %v443 = vld [vmem:[%s382 + $0x1c0] sm:$0xff]
      %v444 = vld [vmem:[%s382 + $0x1c8] sm:$0xff]
      %v445 = vld [vmem:[%s382 + $0x1d0] sm:$0xff]
      %v446 = vld [vmem:[%s382 + $0x1d8] sm:$0xff]
      %v447 = vld [vmem:[%s382 + $0x1e0] sm:$0xff]
      %v448 = vld [vmem:[%s382 + $0x1e8] sm:$0xff]
      %v449 = vld [vmem:[%s382 + $0x1f0] sm:$0xff]
      %v450 = vld [vmem:[%s382 + $0x1f8] sm:$0xff]
      %v451 = vld [vmem:[%s1] sm:$0x7]
      %v452 = vld [vmem:[%s2] sm:$0x1]
      %v454 = vlaneseq
      %v455 = vshrl.u32 %v454, 7
      %v456 = vsub.s32 0, %v455
      %v457 = vrot.slane %v452, %v456
      %vm459 = vcmask 23552
      %v461 = vsel %vm459, %v387, 0
      %v464 = vsel %vm459, %v388, 0
      %v467 = vsel %vm459, %v389, 0
      %v470 = vsel %vm459, %v390, 0
      %v473 = vsel %vm459, %v391, 0
      %v476 = vsel %vm459, %v392, 0
      %v479 = vsel %vm459, %v393, 0
      %v482 = vsel %vm459, %v394, 0
      %v485 = vsel %vm459, %v395, 0
      %v488 = vsel %vm459, %v396, 0
      %v491 = vsel %vm459, %v397, 0
      %v494 = vsel %vm459, %v398, 0
      %v497 = vsel %vm459, %v399, 0
      %v500 = vsel %vm459, %v400, 0
      %v503 = vsel %vm459, %v401, 0
      %v506 = vsel %vm459, %v402, 0
      %v509 = vsel %vm459, %v403, 0
      %v512 = vsel %vm459, %v404, 0
      %v515 = vsel %vm459, %v405, 0
      %v518 = vsel %vm459, %v406, 0
      %v521 = vsel %vm459, %v407, 0
      %v524 = vsel %vm459, %v408, 0
      %v527 = vsel %vm459, %v409, 0
      %v530 = vsel %vm459, %v410, 0
      %v533 = vsel %vm459, %v411, 0
      %v536 = vsel %vm459, %v412, 0
      %v539 = vsel %vm459, %v413, 0
      %v542 = vsel %vm459, %v414, 0
      %v545 = vsel %vm459, %v415, 0
      %v548 = vsel %vm459, %v416, 0
      %v551 = vsel %vm459, %v417, 0
      %v554 = vsel %vm459, %v418, 0
      %v557 = vsel %vm459, %v419, 0
      %v560 = vsel %vm459, %v420, 0
      %v563 = vsel %vm459, %v421, 0
      %v566 = vsel %vm459, %v422, 0
      %v569 = vsel %vm459, %v423, 0
      %v572 = vsel %vm459, %v424, 0
      %v575 = vsel %vm459, %v425, 0
      %v578 = vsel %vm459, %v426, 0
      %v581 = vsel %vm459, %v427, 0
      %v584 = vsel %vm459, %v428, 0
      %v587 = vsel %vm459, %v429, 0
      %v590 = vsel %vm459, %v430, 0
      %v593 = vsel %vm459, %v431, 0
      %v596 = vsel %vm459, %v432, 0
      %v599 = vsel %vm459, %v433, 0
      %v602 = vsel %vm459, %v434, 0
      %v605 = vsel %vm459, %v435, 0
      %v608 = vsel %vm459, %v436, 0
      %v611 = vsel %vm459, %v437, 0
      %v614 = vsel %vm459, %v438, 0
      %v617 = vsel %vm459, %v439, 0
      %v620 = vsel %vm459, %v440, 0
      %v623 = vsel %vm459, %v441, 0
      %v626 = vsel %vm459, %v442, 0
      %v629 = vsel %vm459, %v443, 0
      %v632 = vsel %vm459, %v444, 0
      %v635 = vsel %vm459, %v445, 0
      %v638 = vsel %vm459, %v446, 0
      %v641 = vsel %vm459, %v447, 0
      %v644 = vsel %vm459, %v448, 0
      %v647 = vsel %vm459, %v449, 0
      %v650 = vsel %vm459, %v450, 0
      %vm652 = vcmask 1042432
      %v654 = vsel %vm652, %v451, 0
      %656 = vmatprep.subr.mxu0 0.0
      %657 = vmatpush1.msra.mxu0 0.0
      %658 = vmatprep.subr.mxu0 0.0
      %659 = vmatpush1.msra.mxu0 0.0
      %660 = vmatprep.subr.mxu0 0.0
      %661 = vmatpush1.msra.mxu0 0.0
      %662 = vmatprep.subr.mxu0 0.0
      %663 = vmatpush1.msra.mxu0 0.0
      %664 = vmatprep.subr.mxu0 0.0
      %665 = vmatpush1.msra.mxu0 0.0
      %666 = vmatprep.subr.mxu0 0.0
      %667 = vmatpush1.msra.mxu0 0.0
      %668 = vmatprep.subr.mxu0 0.0
      %669 = vmatpush1.msra.mxu0 0.0
      %670 = vmatprep.subr.mxu0 0.0
      %671 = vmatpush1.msra.mxu0 0.0
      %672 = vmatprep.subr.mxu0 0.0
      %673 = vmatpush1.msra.mxu0 0.0
      %674 = vmatprep.subr.mxu0 0.0
      %675 = vmatpush1.msra.mxu0 0.0
      %676 = vmatprep.subr.mxu0 0.0
      %677 = vmatpush1.msra.mxu0 0.0
      %678 = vmatprep.subr.mxu0 0.0
      %679 = vmatpush1.msra.mxu0 0.0
      %680 = vmatprep.subr.mxu0 0.0
      %681 = vmatpush1.msra.mxu0 0.0
      %682 = vmatprep.subr.mxu0 0.0
      %683 = vmatpush1.msra.mxu0 0.0
      %684 = vmatprep.subr.mxu0 0.0
      %685 = vmatpush1.msra.mxu0 0.0
      %686 = vmatprep.subr.mxu0 0.0
      %687 = vmatpush1.msra.mxu0 %v654
      %688 = vmatprep.subr.mxu0 0.0
      %689 = vmatpush2.msra.mxu0 0.0
      %690 = vmatprep.subr.mxu0 0.0
      %691 = vmatpush2.msra.mxu0 0.0
      %692 = vmatprep.subr.mxu0 0.0
      %693 = vmatpush2.msra.mxu0 0.0
      %694 = vmatprep.subr.mxu0 0.0
      %695 = vmatpush2.msra.mxu0 0.0
      %696 = vmatprep.subr.mxu0 0.0
      %697 = vmatpush2.msra.mxu0 0.0
      %698 = vmatprep.subr.mxu0 0.0
      %699 = vmatpush2.msra.mxu0 0.0
      %700 = vmatprep.subr.mxu0 0.0
      %701 = vmatpush2.msra.mxu0 0.0
      %702 = vmatprep.subr.mxu0 0.0
      %703 = vmatpush2.msra.mxu0 0.0
      %704 = vmatprep.subr.mxu0 0.0
      %705 = vmatpush2.msra.mxu0 0.0
      %706 = vmatprep.subr.mxu0 0.0
      %707 = vmatpush2.msra.mxu0 0.0
      %708 = vmatprep.subr.mxu0 0.0
      %709 = vmatpush2.msra.mxu0 0.0
      %710 = vmatprep.subr.mxu0 0.0
      %711 = vmatpush2.msra.mxu0 0.0
      %712 = vmatprep.subr.mxu0 0.0
      %713 = vmatpush2.msra.mxu0 0.0
      %714 = vmatprep.subr.mxu0 0.0
      %715 = vmatpush2.msra.mxu0 0.0
      %716 = vmatprep.subr.mxu0 0.0
      %717 = vmatpush2.msra.mxu0 0.0
      %718 = vmatprep.subr.mxu0 0.0
      %719 = vmatpush2.msra.mxu0 0.0
      %720 = vmatprep.mubr.f32.mxu0 0.0
      %721 = vmatmul.mubr.f32.gmra.mxu0 %v461
      %v722 = vpop.f32.mrf.mxu0
      %v723 = vadd.f32 %v457, %v722
      %v724 = vpop.f32.mrf.mxu0
      %725 = vmatprep.mubr.f32.mxu0 0.0
      %726 = vmatmul.mubr.f32.gmra.mxu0 %v464
      %v727 = vpop.f32.mrf.mxu0
      %v728 = vadd.f32 %v457, %v727
      %v729 = vpop.f32.mrf.mxu0
      %730 = vmatprep.mubr.f32.mxu0 0.0
      %731 = vmatmul.mubr.f32.gmra.mxu0 %v467
      %v732 = vpop.f32.mrf.mxu0
      %v733 = vadd.f32 %v457, %v732
      %v734 = vpop.f32.mrf.mxu0
      %735 = vmatprep.mubr.f32.mxu0 0.0
      %736 = vmatmul.mubr.f32.gmra.mxu0 %v470
      %v737 = vpop.f32.mrf.mxu0
      %v738 = vadd.f32 %v457, %v737
      %v739 = vpop.f32.mrf.mxu0
      %740 = vmatprep.mubr.f32.mxu0 0.0
      %741 = vmatmul.mubr.f32.gmra.mxu0 %v473
      %v742 = vpop.f32.mrf.mxu0
      %v743 = vadd.f32 %v457, %v742
      %v744 = vpop.f32.mrf.mxu0
      %745 = vmatprep.mubr.f32.mxu0 0.0
      %746 = vmatmul.mubr.f32.gmra.mxu0 %v476
      %v747 = vpop.f32.mrf.mxu0
      %v748 = vadd.f32 %v457, %v747
      %v749 = vpop.f32.mrf.mxu0
      %750 = vmatprep.mubr.f32.mxu0 0.0
      %751 = vmatmul.mubr.f32.gmra.mxu0 %v479
      %v752 = vpop.f32.mrf.mxu0
      %v753 = vadd.f32 %v457, %v752
      %v754 = vpop.f32.mrf.mxu0
      %755 = vmatprep.mubr.f32.mxu0 0.0
      %756 = vmatmul.mubr.f32.gmra.mxu0 %v482
      %v757 = vpop.f32.mrf.mxu0
      %v758 = vadd.f32 %v457, %v757
      %v759 = vpop.f32.mrf.mxu0
      %760 = vmatprep.mubr.f32.mxu0 0.0
      %761 = vmatmul.mubr.f32.gmra.mxu0 %v485
      %v762 = vpop.f32.mrf.mxu0
      %v763 = vadd.f32 %v457, %v762
      %v764 = vpop.f32.mrf.mxu0
      %765 = vmatprep.mubr.f32.mxu0 0.0
      %766 = vmatmul.mubr.f32.gmra.mxu0 %v488
      %v767 = vpop.f32.mrf.mxu0
      %v768 = vadd.f32 %v457, %v767
      %v769 = vpop.f32.mrf.mxu0
      %770 = vmatprep.mubr.f32.mxu0 0.0
      %771 = vmatmul.mubr.f32.gmra.mxu0 %v491
      %v772 = vpop.f32.mrf.mxu0
      %v773 = vadd.f32 %v457, %v772
      %v774 = vpop.f32.mrf.mxu0
      %775 = vmatprep.mubr.f32.mxu0 0.0
      %776 = vmatmul.mubr.f32.gmra.mxu0 %v494
      %v777 = vpop.f32.mrf.mxu0
      %v778 = vadd.f32 %v457, %v777
      %v779 = vpop.f32.mrf.mxu0
      %780 = vmatprep.mubr.f32.mxu0 0.0
      %781 = vmatmul.mubr.f32.gmra.mxu0 %v497
      %v782 = vpop.f32.mrf.mxu0
      %v783 = vadd.f32 %v457, %v782
      %v784 = vpop.f32.mrf.mxu0
      %785 = vmatprep.mubr.f32.mxu0 0.0
      %786 = vmatmul.mubr.f32.gmra.mxu0 %v500
      %v787 = vpop.f32.mrf.mxu0
      %v788 = vadd.f32 %v457, %v787
      %v789 = vpop.f32.mrf.mxu0
      %790 = vmatprep.mubr.f32.mxu0 0.0
      %791 = vmatmul.mubr.f32.gmra.mxu0 %v503
      %v792 = vpop.f32.mrf.mxu0
      %v793 = vadd.f32 %v457, %v792
      %v794 = vpop.f32.mrf.mxu0
      %795 = vmatprep.mubr.f32.mxu0 0.0
      %796 = vmatmul.mubr.f32.gmra.mxu0 %v506
      %v797 = vpop.f32.mrf.mxu0
      %v798 = vadd.f32 %v457, %v797
      %v799 = vpop.f32.mrf.mxu0
      %800 = vmatprep.mubr.f32.mxu0 0.0
      %801 = vmatmul.mubr.f32.gmra.mxu0 %v509
      %v802 = vpop.f32.mrf.mxu0
      %v803 = vadd.f32 %v457, %v802
      %v804 = vpop.f32.mrf.mxu0
      %805 = vmatprep.mubr.f32.mxu0 0.0
      %806 = vmatmul.mubr.f32.gmra.mxu0 %v512
      %v807 = vpop.f32.mrf.mxu0
      %v808 = vadd.f32 %v457, %v807
      %v809 = vpop.f32.mrf.mxu0
      %810 = vmatprep.mubr.f32.mxu0 0.0
      %811 = vmatmul.mubr.f32.gmra.mxu0 %v515
      %v812 = vpop.f32.mrf.mxu0
      %v813 = vadd.f32 %v457, %v812
      %v814 = vpop.f32.mrf.mxu0
      %815 = vmatprep.mubr.f32.mxu0 0.0
      %816 = vmatmul.mubr.f32.gmra.mxu0 %v518
      %v817 = vpop.f32.mrf.mxu0
      %v818 = vadd.f32 %v457, %v817
      %v819 = vpop.f32.mrf.mxu0
      %820 = vmatprep.mubr.f32.mxu0 0.0
      %821 = vmatmul.mubr.f32.gmra.mxu0 %v521
      %v822 = vpop.f32.mrf.mxu0
      %v823 = vadd.f32 %v457, %v822
      %v824 = vpop.f32.mrf.mxu0
      %825 = vmatprep.mubr.f32.mxu0 0.0
      %826 = vmatmul.mubr.f32.gmra.mxu0 %v524
      %v827 = vpop.f32.mrf.mxu0
      %v828 = vadd.f32 %v457, %v827
      %v829 = vpop.f32.mrf.mxu0
      %830 = vmatprep.mubr.f32.mxu0 0.0
      %831 = vmatmul.mubr.f32.gmra.mxu0 %v527
      %v832 = vpop.f32.mrf.mxu0
      %v833 = vadd.f32 %v457, %v832
      %v834 = vpop.f32.mrf.mxu0
      %835 = vmatprep.mubr.f32.mxu0 0.0
      %836 = vmatmul.mubr.f32.gmra.mxu0 %v530
      %v837 = vpop.f32.mrf.mxu0
      %v838 = vadd.f32 %v457, %v837
      %v839 = vpop.f32.mrf.mxu0
      %840 = vmatprep.mubr.f32.mxu0 0.0
      %841 = vmatmul.mubr.f32.gmra.mxu0 %v533
      %v842 = vpop.f32.mrf.mxu0
      %v843 = vadd.f32 %v457, %v842
      %v844 = vpop.f32.mrf.mxu0
      %845 = vmatprep.mubr.f32.mxu0 0.0
      %846 = vmatmul.mubr.f32.gmra.mxu0 %v536
      %v847 = vpop.f32.mrf.mxu0
      %v848 = vadd.f32 %v457, %v847
      %v849 = vpop.f32.mrf.mxu0
      %850 = vmatprep.mubr.f32.mxu0 0.0
      %851 = vmatmul.mubr.f32.gmra.mxu0 %v539
      %v852 = vpop.f32.mrf.mxu0
      %v853 = vadd.f32 %v457, %v852
      %v854 = vpop.f32.mrf.mxu0
      %855 = vmatprep.mubr.f32.mxu0 0.0
      %856 = vmatmul.mubr.f32.gmra.mxu0 %v542
      %v857 = vpop.f32.mrf.mxu0
      %v858 = vadd.f32 %v457, %v857
      %v859 = vpop.f32.mrf.mxu0
      %860 = vmatprep.mubr.f32.mxu0 0.0
      %861 = vmatmul.mubr.f32.gmra.mxu0 %v545
      %v862 = vpop.f32.mrf.mxu0
      %v863 = vadd.f32 %v457, %v862
      %v864 = vpop.f32.mrf.mxu0
      %865 = vmatprep.mubr.f32.mxu0 0.0
      %866 = vmatmul.mubr.f32.gmra.mxu0 %v548
      %v867 = vpop.f32.mrf.mxu0
      %v868 = vadd.f32 %v457, %v867
      %v869 = vpop.f32.mrf.mxu0
      %870 = vmatprep.mubr.f32.mxu0 0.0
      %871 = vmatmul.mubr.f32.gmra.mxu0 %v551
      %v872 = vpop.f32.mrf.mxu0
      %v873 = vadd.f32 %v457, %v872
      %v874 = vpop.f32.mrf.mxu0
      %875 = vmatprep.mubr.f32.mxu0 0.0
      %876 = vmatmul.mubr.f32.gmra.mxu0 %v554
      %v877 = vpop.f32.mrf.mxu0
      %v878 = vadd.f32 %v457, %v877
      %v879 = vpop.f32.mrf.mxu0
      %880 = vmatprep.mubr.f32.mxu0 0.0
      %881 = vmatmul.mubr.f32.gmra.mxu0 %v557
      %v882 = vpop.f32.mrf.mxu0
      %v883 = vadd.f32 %v457, %v882
      %v884 = vpop.f32.mrf.mxu0
      %885 = vmatprep.mubr.f32.mxu0 0.0
      %886 = vmatmul.mubr.f32.gmra.mxu0 %v560
      %v887 = vpop.f32.mrf.mxu0
      %v888 = vadd.f32 %v457, %v887
      %v889 = vpop.f32.mrf.mxu0
      %890 = vmatprep.mubr.f32.mxu0 0.0
      %891 = vmatmul.mubr.f32.gmra.mxu0 %v563
      %v892 = vpop.f32.mrf.mxu0
      %v893 = vadd.f32 %v457, %v892
      %v894 = vpop.f32.mrf.mxu0
      %895 = vmatprep.mubr.f32.mxu0 0.0
      %896 = vmatmul.mubr.f32.gmra.mxu0 %v566
      %v897 = vpop.f32.mrf.mxu0
      %v898 = vadd.f32 %v457, %v897
      %v899 = vpop.f32.mrf.mxu0
      %900 = vmatprep.mubr.f32.mxu0 0.0
      %901 = vmatmul.mubr.f32.gmra.mxu0 %v569
      %v902 = vpop.f32.mrf.mxu0
      %v903 = vadd.f32 %v457, %v902
      %v904 = vpop.f32.mrf.mxu0
      %905 = vmatprep.mubr.f32.mxu0 0.0
      %906 = vmatmul.mubr.f32.gmra.mxu0 %v572
      %v907 = vpop.f32.mrf.mxu0
      %v908 = vadd.f32 %v457, %v907
      %v909 = vpop.f32.mrf.mxu0
      %910 = vmatprep.mubr.f32.mxu0 0.0
      %911 = vmatmul.mubr.f32.gmra.mxu0 %v575
      %v912 = vpop.f32.mrf.mxu0
      %v913 = vadd.f32 %v457, %v912
      %v914 = vpop.f32.mrf.mxu0
      %915 = vmatprep.mubr.f32.mxu0 0.0
      %916 = vmatmul.mubr.f32.gmra.mxu0 %v578
      %v917 = vpop.f32.mrf.mxu0
      %v918 = vadd.f32 %v457, %v917
      %v919 = vpop.f32.mrf.mxu0
      %920 = vmatprep.mubr.f32.mxu0 0.0
      %921 = vmatmul.mubr.f32.gmra.mxu0 %v581
      %v922 = vpop.f32.mrf.mxu0
      %v923 = vadd.f32 %v457, %v922
      %v924 = vpop.f32.mrf.mxu0
      %925 = vmatprep.mubr.f32.mxu0 0.0
      %926 = vmatmul.mubr.f32.gmra.mxu0 %v584
      %v927 = vpop.f32.mrf.mxu0
      %v928 = vadd.f32 %v457, %v927
      %v929 = vpop.f32.mrf.mxu0
      %930 = vmatprep.mubr.f32.mxu0 0.0
      %931 = vmatmul.mubr.f32.gmra.mxu0 %v587
      %v932 = vpop.f32.mrf.mxu0
      %v933 = vadd.f32 %v457, %v932
      %v934 = vpop.f32.mrf.mxu0
      %935 = vmatprep.mubr.f32.mxu0 0.0
      %936 = vmatmul.mubr.f32.gmra.mxu0 %v590
      %v937 = vpop.f32.mrf.mxu0
      %v938 = vadd.f32 %v457, %v937
      %v939 = vpop.f32.mrf.mxu0
      %940 = vmatprep.mubr.f32.mxu0 0.0
      %941 = vmatmul.mubr.f32.gmra.mxu0 %v593
      %v942 = vpop.f32.mrf.mxu0
      %v943 = vadd.f32 %v457, %v942
      %v944 = vpop.f32.mrf.mxu0
      %945 = vmatprep.mubr.f32.mxu0 0.0
      %946 = vmatmul.mubr.f32.gmra.mxu0 %v596
      %v947 = vpop.f32.mrf.mxu0
      %v948 = vadd.f32 %v457, %v947
      %v949 = vpop.f32.mrf.mxu0
      %950 = vmatprep.mubr.f32.mxu0 0.0
      %951 = vmatmul.mubr.f32.gmra.mxu0 %v599
      %v952 = vpop.f32.mrf.mxu0
      %v953 = vadd.f32 %v457, %v952
      %v954 = vpop.f32.mrf.mxu0
      %955 = vmatprep.mubr.f32.mxu0 0.0
      %956 = vmatmul.mubr.f32.gmra.mxu0 %v602
      %v957 = vpop.f32.mrf.mxu0
      %v958 = vadd.f32 %v457, %v957
      %v959 = vpop.f32.mrf.mxu0
      %960 = vmatprep.mubr.f32.mxu0 0.0
      %961 = vmatmul.mubr.f32.gmra.mxu0 %v605
      %v962 = vpop.f32.mrf.mxu0
      %v963 = vadd.f32 %v457, %v962
      %v964 = vpop.f32.mrf.mxu0
      %965 = vmatprep.mubr.f32.mxu0 0.0
      %966 = vmatmul.mubr.f32.gmra.mxu0 %v608
      %v967 = vpop.f32.mrf.mxu0
      %v968 = vadd.f32 %v457, %v967
      %v969 = vpop.f32.mrf.mxu0
      %970 = vmatprep.mubr.f32.mxu0 0.0
      %971 = vmatmul.mubr.f32.gmra.mxu0 %v611
      %v972 = vpop.f32.mrf.mxu0
      %v973 = vadd.f32 %v457, %v972
      %v974 = vpop.f32.mrf.mxu0
      %975 = vmatprep.mubr.f32.mxu0 0.0
      %976 = vmatmul.mubr.f32.gmra.mxu0 %v614
      %v977 = vpop.f32.mrf.mxu0
      %v978 = vadd.f32 %v457, %v977
      %v979 = vpop.f32.mrf.mxu0
      %980 = vmatprep.mubr.f32.mxu0 0.0
      %981 = vmatmul.mubr.f32.gmra.mxu0 %v617
      %v982 = vpop.f32.mrf.mxu0
      %v983 = vadd.f32 %v457, %v982
      %v984 = vpop.f32.mrf.mxu0
      %985 = vmatprep.mubr.f32.mxu0 0.0
      %986 = vmatmul.mubr.f32.gmra.mxu0 %v620
      %v987 = vpop.f32.mrf.mxu0
      %v988 = vadd.f32 %v457, %v987
      %v989 = vpop.f32.mrf.mxu0
      %990 = vmatprep.mubr.f32.mxu0 0.0
      %991 = vmatmul.mubr.f32.gmra.mxu0 %v623
      %v992 = vpop.f32.mrf.mxu0
      %v993 = vadd.f32 %v457, %v992
      %v994 = vpop.f32.mrf.mxu0
      %995 = vmatprep.mubr.f32.mxu0 0.0
      %996 = vmatmul.mubr.f32.gmra.mxu0 %v626
      %v997 = vpop.f32.mrf.mxu0
      %v998 = vadd.f32 %v457, %v997
      %v999 = vpop.f32.mrf.mxu0
      %1000 = vmatprep.mubr.f32.mxu0 0.0
      %1001 = vmatmul.mubr.f32.gmra.mxu0 %v629
      %v1002 = vpop.f32.mrf.mxu0
      %v1003 = vadd.f32 %v457, %v1002
      %v1004 = vpop.f32.mrf.mxu0
      %1005 = vmatprep.mubr.f32.mxu0 0.0
      %1006 = vmatmul.mubr.f32.gmra.mxu0 %v632
      %v1007 = vpop.f32.mrf.mxu0
      %v1008 = vadd.f32 %v457, %v1007
      %v1009 = vpop.f32.mrf.mxu0
      %1010 = vmatprep.mubr.f32.mxu0 0.0
      %1011 = vmatmul.mubr.f32.gmra.mxu0 %v635
      %v1012 = vpop.f32.mrf.mxu0
      %v1013 = vadd.f32 %v457, %v1012
      %v1014 = vpop.f32.mrf.mxu0
      %1015 = vmatprep.mubr.f32.mxu0 0.0
      %1016 = vmatmul.mubr.f32.gmra.mxu0 %v638
      %v1017 = vpop.f32.mrf.mxu0
      %v1018 = vadd.f32 %v457, %v1017
      %v1019 = vpop.f32.mrf.mxu0
      %1020 = vmatprep.mubr.f32.mxu0 0.0
      %1021 = vmatmul.mubr.f32.gmra.mxu0 %v641
      %v1022 = vpop.f32.mrf.mxu0
      %v1023 = vadd.f32 %v457, %v1022
      %v1024 = vpop.f32.mrf.mxu0
      %1025 = vmatprep.mubr.f32.mxu0 0.0
      %1026 = vmatmul.mubr.f32.gmra.mxu0 %v644
      %v1027 = vpop.f32.mrf.mxu0
      %v1028 = vadd.f32 %v457, %v1027
      %v1029 = vpop.f32.mrf.mxu0
      %1030 = vmatprep.mubr.f32.mxu0 0.0
      %1031 = vmatmul.mubr.f32.gmra.mxu0 %v647
      %v1032 = vpop.f32.mrf.mxu0
      %v1033 = vadd.f32 %v457, %v1032
      %v1034 = vpop.f32.mrf.mxu0
      %1035 = vmatprep.mubr.f32.mxu0 0.0
      %1036 = vmatmul.mubr.f32.gmra.mxu0 %v650
      %v1037 = vpop.f32.mrf.mxu0
      %v1038 = vadd.f32 %v457, %v1037
      %v1039 = vpop.f32.mrf.mxu0
      %1040 = vdwg.mxu0
      %v1041 = vmax.f32 %v723, 0.0
      %v1042 = vmax.f32 %v728, 0.0
      %v1043 = vmax.f32 %v733, 0.0
      %v1044 = vmax.f32 %v738, 0.0
      %v1045 = vmax.f32 %v743, 0.0
      %v1046 = vmax.f32 %v748, 0.0
      %v1047 = vmax.f32 %v753, 0.0
      %v1048 = vmax.f32 %v758, 0.0
      %v1049 = vmax.f32 %v763, 0.0
      %v1050 = vmax.f32 %v768, 0.0
      %v1051 = vmax.f32 %v773, 0.0
      %v1052 = vmax.f32 %v778, 0.0
      %v1053 = vmax.f32 %v783, 0.0
      %v1054 = vmax.f32 %v788, 0.0
      %v1055 = vmax.f32 %v793, 0.0
      %v1056 = vmax.f32 %v798, 0.0
      %v1057 = vmax.f32 %v803, 0.0
      %v1058 = vmax.f32 %v808, 0.0
      %v1059 = vmax.f32 %v813, 0.0
      %v1060 = vmax.f32 %v818, 0.0
      %v1061 = vmax.f32 %v823, 0.0
      %v1062 = vmax.f32 %v828, 0.0
      %v1063 = vmax.f32 %v833, 0.0
      %v1064 = vmax.f32 %v838, 0.0
      %v1065 = vmax.f32 %v843, 0.0
      %v1066 = vmax.f32 %v848, 0.0
      %v1067 = vmax.f32 %v853, 0.0
      %v1068 = vmax.f32 %v858, 0.0
      %v1069 = vmax.f32 %v863, 0.0
      %v1070 = vmax.f32 %v868, 0.0
      %v1071 = vmax.f32 %v873, 0.0
      %v1072 = vmax.f32 %v878, 0.0
      %v1073 = vmax.f32 %v883, 0.0
      %v1074 = vmax.f32 %v888, 0.0
      %v1075 = vmax.f32 %v893, 0.0
      %v1076 = vmax.f32 %v898, 0.0
      %v1077 = vmax.f32 %v903, 0.0
      %v1078 = vmax.f32 %v908, 0.0
      %v1079 = vmax.f32 %v913, 0.0
      %v1080 = vmax.f32 %v918, 0.0
      %v1081 = vmax.f32 %v923, 0.0
      %v1082 = vmax.f32 %v928, 0.0
      %v1083 = vmax.f32 %v933, 0.0
      %v1084 = vmax.f32 %v938, 0.0
      %v1085 = vmax.f32 %v943, 0.0
      %v1086 = vmax.f32 %v948, 0.0
      %v1087 = vmax.f32 %v953, 0.0
      %v1088 = vmax.f32 %v958, 0.0
      %v1089 = vmax.f32 %v963, 0.0
      %v1090 = vmax.f32 %v968, 0.0
      %v1091 = vmax.f32 %v973, 0.0
      %v1092 = vmax.f32 %v978, 0.0
      %v1093 = vmax.f32 %v983, 0.0
      %v1094 = vmax.f32 %v988, 0.0
      %v1095 = vmax.f32 %v993, 0.0
      %v1096 = vmax.f32 %v998, 0.0
      %v1097 = vmax.f32 %v1003, 0.0
      %v1098 = vmax.f32 %v1008, 0.0
      %v1099 = vmax.f32 %v1013, 0.0
      %v1100 = vmax.f32 %v1018, 0.0
      %v1101 = vmax.f32 %v1023, 0.0
      %v1102 = vmax.f32 %v1028, 0.0
      %v1103 = vmax.f32 %v1033, 0.0
      %v1104 = vmax.f32 %v1038, 0.0
      %v1105 = vld [vmem:[%s3] sm:$0xff]
      %v1106 = vld [vmem:[%s3 + $0x8] sm:$0xff]
      %v1107 = vld [vmem:[%s3 + $0x10] sm:$0xff]
      %v1108 = vld [vmem:[%s3 + $0x18] sm:$0xff]
      %v1109 = vld [vmem:[%s3 + $0x20] sm:$0xff]
      %v1110 = vld [vmem:[%s3 + $0x28] sm:$0xff]
      %v1111 = vld [vmem:[%s3 + $0x30] sm:$0xff]
      %v1112 = vld [vmem:[%s3 + $0x38] sm:$0xff]
      %v1113 = vld [vmem:[%s4] sm:$0x1]
      %v1115 = vlaneseq
      %v1116 = vshrl.u32 %v1115, 7
      %v1117 = vsub.s32 0, %v1116
      %v1118 = vrot.slane %v1113, %v1117
      %vm1120 = vcmask 523264
      %v1122 = vsel %vm1120, %v1041, 0
      %v1125 = vsel %vm1120, %v1042, 0
      %v1128 = vsel %vm1120, %v1043, 0
      %v1131 = vsel %vm1120, %v1044, 0
      %v1134 = vsel %vm1120, %v1045, 0
      %v1137 = vsel %vm1120, %v1046, 0
      %v1140 = vsel %vm1120, %v1047, 0
      %v1143 = vsel %vm1120, %v1048, 0
      %v1146 = vsel %vm1120, %v1049, 0
      %v1149 = vsel %vm1120, %v1050, 0
      %v1152 = vsel %vm1120, %v1051, 0
      %v1155 = vsel %vm1120, %v1052, 0
      %v1158 = vsel %vm1120, %v1053, 0
      %v1161 = vsel %vm1120, %v1054, 0
      %v1164 = vsel %vm1120, %v1055, 0
      %v1167 = vsel %vm1120, %v1056, 0
      %v1170 = vsel %vm1120, %v1057, 0
      %v1173 = vsel %vm1120, %v1058, 0
      %v1176 = vsel %vm1120, %v1059, 0
      %v1179 = vsel %vm1120, %v1060, 0
      %v1182 = vsel %vm1120, %v1061, 0
      %v1185 = vsel %vm1120, %v1062, 0
      %v1188 = vsel %vm1120, %v1063, 0
      %v1191 = vsel %vm1120, %v1064, 0
      %v1194 = vsel %vm1120, %v1065, 0
      %v1197 = vsel %vm1120, %v1066, 0
      %v1200 = vsel %vm1120, %v1067, 0
      %v1203 = vsel %vm1120, %v1068, 0
      %v1206 = vsel %vm1120, %v1069, 0
      %v1209 = vsel %vm1120, %v1070, 0
      %v1212 = vsel %vm1120, %v1071, 0
      %v1215 = vsel %vm1120, %v1072, 0
      %v1218 = vsel %vm1120, %v1073, 0
      %v1221 = vsel %vm1120, %v1074, 0
      %v1224 = vsel %vm1120, %v1075, 0
      %v1227 = vsel %vm1120, %v1076, 0
      %v1230 = vsel %vm1120, %v1077, 0
      %v1233 = vsel %vm1120, %v1078, 0
      %v1236 = vsel %vm1120, %v1079, 0
      %v1239 = vsel %vm1120, %v1080, 0
      %v1242 = vsel %vm1120, %v1081, 0
      %v1245 = vsel %vm1120, %v1082, 0
      %v1248 = vsel %vm1120, %v1083, 0
      %v1251 = vsel %vm1120, %v1084, 0
      %v1254 = vsel %vm1120, %v1085, 0
      %v1257 = vsel %vm1120, %v1086, 0
      %v1260 = vsel %vm1120, %v1087, 0
      %v1263 = vsel %vm1120, %v1088, 0
      %v1266 = vsel %vm1120, %v1089, 0
      %v1269 = vsel %vm1120, %v1090, 0
      %v1272 = vsel %vm1120, %v1091, 0
      %v1275 = vsel %vm1120, %v1092, 0
      %v1278 = vsel %vm1120, %v1093, 0
      %v1281 = vsel %vm1120, %v1094, 0
      %v1284 = vsel %vm1120, %v1095, 0
      %v1287 = vsel %vm1120, %v1096, 0
      %v1290 = vsel %vm1120, %v1097, 0
      %v1293 = vsel %vm1120, %v1098, 0
      %v1296 = vsel %vm1120, %v1099, 0
      %v1299 = vsel %vm1120, %v1100, 0
      %v1302 = vsel %vm1120, %v1101, 0
      %v1305 = vsel %vm1120, %v1102, 0
      %v1308 = vsel %vm1120, %v1103, 0
      %v1311 = vsel %vm1120, %v1104, 0
      %1313 = vmatprep.subr.mxu0 0.0
      %1314 = vmatpush1.msra.mxu0 0.0
      %1315 = vmatprep.subr.mxu0 0.0
      %1316 = vmatpush1.msra.mxu0 0.0
      %1317 = vmatprep.subr.mxu0 0.0
      %1318 = vmatpush1.msra.mxu0 0.0
      %1319 = vmatprep.subr.mxu0 0.0
      %1320 = vmatpush1.msra.mxu0 0.0
      %1321 = vmatprep.subr.mxu0 0.0
      %1322 = vmatpush1.msra.mxu0 0.0
      %1323 = vmatprep.subr.mxu0 0.0
      %1324 = vmatpush1.msra.mxu0 0.0
      %1325 = vmatprep.subr.mxu0 0.0
      %1326 = vmatpush1.msra.mxu0 0.0
      %1327 = vmatprep.subr.mxu0 0.0
      %1328 = vmatpush1.msra.mxu0 0.0
      %1329 = vmatprep.subr.mxu0 0.0
      %1330 = vmatpush1.msra.mxu0 %v1112
      %1331 = vmatprep.subr.mxu0 0.0
      %1332 = vmatpush1.msra.mxu0 %v1111
      %1333 = vmatprep.subr.mxu0 0.0
      %1334 = vmatpush1.msra.mxu0 %v1110
      %1335 = vmatprep.subr.mxu0 0.0
      %1336 = vmatpush1.msra.mxu0 %v1109
      %1337 = vmatprep.subr.mxu0 0.0
      %1338 = vmatpush1.msra.mxu0 %v1108
      %1339 = vmatprep.subr.mxu0 0.0
      %1340 = vmatpush1.msra.mxu0 %v1107
      %1341 = vmatprep.subr.mxu0 0.0
      %1342 = vmatpush1.msra.mxu0 %v1106
      %1343 = vmatprep.subr.mxu0 0.0
      %1344 = vmatpush1.msra.mxu0 %v1105
      %1345 = vmatprep.subr.mxu0 0.0
      %1346 = vmatpush2.msra.mxu0 0.0
      %1347 = vmatprep.subr.mxu0 0.0
      %1348 = vmatpush2.msra.mxu0 0.0
      %1349 = vmatprep.subr.mxu0 0.0
      %1350 = vmatpush2.msra.mxu0 0.0
      %1351 = vmatprep.subr.mxu0 0.0
      %1352 = vmatpush2.msra.mxu0 0.0
      %1353 = vmatprep.subr.mxu0 0.0
      %1354 = vmatpush2.msra.mxu0 0.0
      %1355 = vmatprep.subr.mxu0 0.0
      %1356 = vmatpush2.msra.mxu0 0.0
      %1357 = vmatprep.subr.mxu0 0.0
      %1358 = vmatpush2.msra.mxu0 0.0
      %1359 = vmatprep.subr.mxu0 0.0
      %1360 = vmatpush2.msra.mxu0 0.0
      %1361 = vmatprep.subr.mxu0 0.0
      %1362 = vmatpush2.msra.mxu0 0.0
      %1363 = vmatprep.subr.mxu0 0.0
      %1364 = vmatpush2.msra.mxu0 0.0
      %1365 = vmatprep.subr.mxu0 0.0
      %1366 = vmatpush2.msra.mxu0 0.0
      %1367 = vmatprep.subr.mxu0 0.0
      %1368 = vmatpush2.msra.mxu0 0.0
      %1369 = vmatprep.subr.mxu0 0.0
      %1370 = vmatpush2.msra.mxu0 0.0
      %1371 = vmatprep.subr.mxu0 0.0
      %1372 = vmatpush2.msra.mxu0 0.0
      %1373 = vmatprep.subr.mxu0 0.0
      %1374 = vmatpush2.msra.mxu0 0.0
      %1375 = vmatprep.subr.mxu0 0.0
      %1376 = vmatpush2.msra.mxu0 0.0
      %1377 = vmatprep.mubr.f32.mxu0 0.0
      %1378 = vmatmul.mubr.f32.gmra.mxu0 %v1122
      %v1379 = vpop.f32.mrf.mxu0
      %v1380 = vadd.f32 %v1118, %v1379
      %v1381 = vpop.f32.mrf.mxu0
      %1382 = vmatprep.mubr.f32.mxu0 0.0
      %1383 = vmatmul.mubr.f32.gmra.mxu0 %v1125
      %v1384 = vpop.f32.mrf.mxu0
      %v1385 = vadd.f32 %v1118, %v1384
      %v1386 = vpop.f32.mrf.mxu0
      %1387 = vmatprep.mubr.f32.mxu0 0.0
      %1388 = vmatmul.mubr.f32.gmra.mxu0 %v1128
      %v1389 = vpop.f32.mrf.mxu0
      %v1390 = vadd.f32 %v1118, %v1389
      %v1391 = vpop.f32.mrf.mxu0
      %1392 = vmatprep.mubr.f32.mxu0 0.0
      %1393 = vmatmul.mubr.f32.gmra.mxu0 %v1131
      %v1394 = vpop.f32.mrf.mxu0
      %v1395 = vadd.f32 %v1118, %v1394
      %v1396 = vpop.f32.mrf.mxu0
      %1397 = vmatprep.mubr.f32.mxu0 0.0
      %1398 = vmatmul.mubr.f32.gmra.mxu0 %v1134
      %v1399 = vpop.f32.mrf.mxu0
      %v1400 = vadd.f32 %v1118, %v1399
      %v1401 = vpop.f32.mrf.mxu0
      %1402 = vmatprep.mubr.f32.mxu0 0.0
      %1403 = vmatmul.mubr.f32.gmra.mxu0 %v1137
      %v1404 = vpop.f32.mrf.mxu0
      %v1405 = vadd.f32 %v1118, %v1404
      %v1406 = vpop.f32.mrf.mxu0
      %1407 = vmatprep.mubr.f32.mxu0 0.0
      %1408 = vmatmul.mubr.f32.gmra.mxu0 %v1140
      %v1409 = vpop.f32.mrf.mxu0
      %v1410 = vadd.f32 %v1118, %v1409
      %v1411 = vpop.f32.mrf.mxu0
      %1412 = vmatprep.mubr.f32.mxu0 0.0
      %1413 = vmatmul.mubr.f32.gmra.mxu0 %v1143
      %v1414 = vpop.f32.mrf.mxu0
      %v1415 = vadd.f32 %v1118, %v1414
      %v1416 = vpop.f32.mrf.mxu0
      %1417 = vmatprep.mubr.f32.mxu0 0.0
      %1418 = vmatmul.mubr.f32.gmra.mxu0 %v1146
      %v1419 = vpop.f32.mrf.mxu0
      %v1420 = vadd.f32 %v1118, %v1419
      %v1421 = vpop.f32.mrf.mxu0
      %1422 = vmatprep.mubr.f32.mxu0 0.0
      %1423 = vmatmul.mubr.f32.gmra.mxu0 %v1149
      %v1424 = vpop.f32.mrf.mxu0
      %v1425 = vadd.f32 %v1118, %v1424
      %v1426 = vpop.f32.mrf.mxu0
      %1427 = vmatprep.mubr.f32.mxu0 0.0
      %1428 = vmatmul.mubr.f32.gmra.mxu0 %v1152
      %v1429 = vpop.f32.mrf.mxu0
      %v1430 = vadd.f32 %v1118, %v1429
      %v1431 = vpop.f32.mrf.mxu0
      %1432 = vmatprep.mubr.f32.mxu0 0.0
      %1433 = vmatmul.mubr.f32.gmra.mxu0 %v1155
      %v1434 = vpop.f32.mrf.mxu0
      %v1435 = vadd.f32 %v1118, %v1434
      %v1436 = vpop.f32.mrf.mxu0
      %1437 = vmatprep.mubr.f32.mxu0 0.0
      %1438 = vmatmul.mubr.f32.gmra.mxu0 %v1158
      %v1439 = vpop.f32.mrf.mxu0
      %v1440 = vadd.f32 %v1118, %v1439
      %v1441 = vpop.f32.mrf.mxu0
      %1442 = vmatprep.mubr.f32.mxu0 0.0
      %1443 = vmatmul.mubr.f32.gmra.mxu0 %v1161
      %v1444 = vpop.f32.mrf.mxu0
      %v1445 = vadd.f32 %v1118, %v1444
      %v1446 = vpop.f32.mrf.mxu0
      %1447 = vmatprep.mubr.f32.mxu0 0.0
      %1448 = vmatmul.mubr.f32.gmra.mxu0 %v1164
      %v1449 = vpop.f32.mrf.mxu0
      %v1450 = vadd.f32 %v1118, %v1449
      %v1451 = vpop.f32.mrf.mxu0
      %1452 = vmatprep.mubr.f32.mxu0 0.0
      %1453 = vmatmul.mubr.f32.gmra.mxu0 %v1167
      %v1454 = vpop.f32.mrf.mxu0
      %v1455 = vadd.f32 %v1118, %v1454
      %v1456 = vpop.f32.mrf.mxu0
      %1457 = vmatprep.mubr.f32.mxu0 0.0
      %1458 = vmatmul.mubr.f32.gmra.mxu0 %v1170
      %v1459 = vpop.f32.mrf.mxu0
      %v1460 = vadd.f32 %v1118, %v1459
      %v1461 = vpop.f32.mrf.mxu0
      %1462 = vmatprep.mubr.f32.mxu0 0.0
      %1463 = vmatmul.mubr.f32.gmra.mxu0 %v1173
      %v1464 = vpop.f32.mrf.mxu0
      %v1465 = vadd.f32 %v1118, %v1464
      %v1466 = vpop.f32.mrf.mxu0
      %1467 = vmatprep.mubr.f32.mxu0 0.0
      %1468 = vmatmul.mubr.f32.gmra.mxu0 %v1176
      %v1469 = vpop.f32.mrf.mxu0
      %v1470 = vadd.f32 %v1118, %v1469
      %v1471 = vpop.f32.mrf.mxu0
      %1472 = vmatprep.mubr.f32.mxu0 0.0
      %1473 = vmatmul.mubr.f32.gmra.mxu0 %v1179
      %v1474 = vpop.f32.mrf.mxu0
      %v1475 = vadd.f32 %v1118, %v1474
      %v1476 = vpop.f32.mrf.mxu0
      %1477 = vmatprep.mubr.f32.mxu0 0.0
      %1478 = vmatmul.mubr.f32.gmra.mxu0 %v1182
      %v1479 = vpop.f32.mrf.mxu0
      %v1480 = vadd.f32 %v1118, %v1479
      %v1481 = vpop.f32.mrf.mxu0
      %1482 = vmatprep.mubr.f32.mxu0 0.0
      %1483 = vmatmul.mubr.f32.gmra.mxu0 %v1185
      %v1484 = vpop.f32.mrf.mxu0
      %v1485 = vadd.f32 %v1118, %v1484
      %v1486 = vpop.f32.mrf.mxu0
      %1487 = vmatprep.mubr.f32.mxu0 0.0
      %1488 = vmatmul.mubr.f32.gmra.mxu0 %v1188
      %v1489 = vpop.f32.mrf.mxu0
      %v1490 = vadd.f32 %v1118, %v1489
      %v1491 = vpop.f32.mrf.mxu0
      %1492 = vmatprep.mubr.f32.mxu0 0.0
      %1493 = vmatmul.mubr.f32.gmra.mxu0 %v1191
      %v1494 = vpop.f32.mrf.mxu0
      %v1495 = vadd.f32 %v1118, %v1494
      %v1496 = vpop.f32.mrf.mxu0
      %1497 = vmatprep.mubr.f32.mxu0 0.0
      %1498 = vmatmul.mubr.f32.gmra.mxu0 %v1194
      %v1499 = vpop.f32.mrf.mxu0
      %v1500 = vadd.f32 %v1118, %v1499
      %v1501 = vpop.f32.mrf.mxu0
      %1502 = vmatprep.mubr.f32.mxu0 0.0
      %1503 = vmatmul.mubr.f32.gmra.mxu0 %v1197
      %v1504 = vpop.f32.mrf.mxu0
      %v1505 = vadd.f32 %v1118, %v1504
      %v1506 = vpop.f32.mrf.mxu0
      %1507 = vmatprep.mubr.f32.mxu0 0.0
      %1508 = vmatmul.mubr.f32.gmra.mxu0 %v1200
      %v1509 = vpop.f32.mrf.mxu0
      %v1510 = vadd.f32 %v1118, %v1509
      %v1511 = vpop.f32.mrf.mxu0
      %1512 = vmatprep.mubr.f32.mxu0 0.0
      %1513 = vmatmul.mubr.f32.gmra.mxu0 %v1203
      %v1514 = vpop.f32.mrf.mxu0
      %v1515 = vadd.f32 %v1118, %v1514
      %v1516 = vpop.f32.mrf.mxu0
      %1517 = vmatprep.mubr.f32.mxu0 0.0
      %1518 = vmatmul.mubr.f32.gmra.mxu0 %v1206
      %v1519 = vpop.f32.mrf.mxu0
      %v1520 = vadd.f32 %v1118, %v1519
      %v1521 = vpop.f32.mrf.mxu0
      %1522 = vmatprep.mubr.f32.mxu0 0.0
      %1523 = vmatmul.mubr.f32.gmra.mxu0 %v1209
      %v1524 = vpop.f32.mrf.mxu0
      %v1525 = vadd.f32 %v1118, %v1524
      %v1526 = vpop.f32.mrf.mxu0
      %1527 = vmatprep.mubr.f32.mxu0 0.0
      %1528 = vmatmul.mubr.f32.gmra.mxu0 %v1212
      %v1529 = vpop.f32.mrf.mxu0
      %v1530 = vadd.f32 %v1118, %v1529
      %v1531 = vpop.f32.mrf.mxu0
      %1532 = vmatprep.mubr.f32.mxu0 0.0
      %1533 = vmatmul.mubr.f32.gmra.mxu0 %v1215
      %v1534 = vpop.f32.mrf.mxu0
      %v1535 = vadd.f32 %v1118, %v1534
      %v1536 = vpop.f32.mrf.mxu0
      %1537 = vmatprep.mubr.f32.mxu0 0.0
      %1538 = vmatmul.mubr.f32.gmra.mxu0 %v1218
      %v1539 = vpop.f32.mrf.mxu0
      %v1540 = vadd.f32 %v1118, %v1539
      %v1541 = vpop.f32.mrf.mxu0
      %1542 = vmatprep.mubr.f32.mxu0 0.0
      %1543 = vmatmul.mubr.f32.gmra.mxu0 %v1221
      %v1544 = vpop.f32.mrf.mxu0
      %v1545 = vadd.f32 %v1118, %v1544
      %v1546 = vpop.f32.mrf.mxu0
      %1547 = vmatprep.mubr.f32.mxu0 0.0
      %1548 = vmatmul.mubr.f32.gmra.mxu0 %v1224
      %v1549 = vpop.f32.mrf.mxu0
      %v1550 = vadd.f32 %v1118, %v1549
      %v1551 = vpop.f32.mrf.mxu0
      %1552 = vmatprep.mubr.f32.mxu0 0.0
      %1553 = vmatmul.mubr.f32.gmra.mxu0 %v1227
      %v1554 = vpop.f32.mrf.mxu0
      %v1555 = vadd.f32 %v1118, %v1554
      %v1556 = vpop.f32.mrf.mxu0
      %1557 = vmatprep.mubr.f32.mxu0 0.0
      %1558 = vmatmul.mubr.f32.gmra.mxu0 %v1230
      %v1559 = vpop.f32.mrf.mxu0
      %v1560 = vadd.f32 %v1118, %v1559
      %v1561 = vpop.f32.mrf.mxu0
      %1562 = vmatprep.mubr.f32.mxu0 0.0
      %1563 = vmatmul.mubr.f32.gmra.mxu0 %v1233
      %v1564 = vpop.f32.mrf.mxu0
      %v1565 = vadd.f32 %v1118, %v1564
      %v1566 = vpop.f32.mrf.mxu0
      %1567 = vmatprep.mubr.f32.mxu0 0.0
      %1568 = vmatmul.mubr.f32.gmra.mxu0 %v1236
      %v1569 = vpop.f32.mrf.mxu0
      %v1570 = vadd.f32 %v1118, %v1569
      %v1571 = vpop.f32.mrf.mxu0
      %1572 = vmatprep.mubr.f32.mxu0 0.0
      %1573 = vmatmul.mubr.f32.gmra.mxu0 %v1239
      %v1574 = vpop.f32.mrf.mxu0
      %v1575 = vadd.f32 %v1118, %v1574
      %v1576 = vpop.f32.mrf.mxu0
      %1577 = vmatprep.mubr.f32.mxu0 0.0
      %1578 = vmatmul.mubr.f32.gmra.mxu0 %v1242
      %v1579 = vpop.f32.mrf.mxu0
      %v1580 = vadd.f32 %v1118, %v1579
      %v1581 = vpop.f32.mrf.mxu0
      %1582 = vmatprep.mubr.f32.mxu0 0.0
      %1583 = vmatmul.mubr.f32.gmra.mxu0 %v1245
      %v1584 = vpop.f32.mrf.mxu0
      %v1585 = vadd.f32 %v1118, %v1584
      %v1586 = vpop.f32.mrf.mxu0
      %1587 = vmatprep.mubr.f32.mxu0 0.0
      %1588 = vmatmul.mubr.f32.gmra.mxu0 %v1248
      %v1589 = vpop.f32.mrf.mxu0
      %v1590 = vadd.f32 %v1118, %v1589
      %v1591 = vpop.f32.mrf.mxu0
      %1592 = vmatprep.mubr.f32.mxu0 0.0
      %1593 = vmatmul.mubr.f32.gmra.mxu0 %v1251
      %v1594 = vpop.f32.mrf.mxu0
      %v1595 = vadd.f32 %v1118, %v1594
      %v1596 = vpop.f32.mrf.mxu0
      %1597 = vmatprep.mubr.f32.mxu0 0.0
      %1598 = vmatmul.mubr.f32.gmra.mxu0 %v1254
      %v1599 = vpop.f32.mrf.mxu0
      %v1600 = vadd.f32 %v1118, %v1599
      %v1601 = vpop.f32.mrf.mxu0
      %1602 = vmatprep.mubr.f32.mxu0 0.0
      %1603 = vmatmul.mubr.f32.gmra.mxu0 %v1257
      %v1604 = vpop.f32.mrf.mxu0
      %v1605 = vadd.f32 %v1118, %v1604
      %v1606 = vpop.f32.mrf.mxu0
      %1607 = vmatprep.mubr.f32.mxu0 0.0
      %1608 = vmatmul.mubr.f32.gmra.mxu0 %v1260
      %v1609 = vpop.f32.mrf.mxu0
      %v1610 = vadd.f32 %v1118, %v1609
      %v1611 = vpop.f32.mrf.mxu0
      %1612 = vmatprep.mubr.f32.mxu0 0.0
      %1613 = vmatmul.mubr.f32.gmra.mxu0 %v1263
      %v1614 = vpop.f32.mrf.mxu0
      %v1615 = vadd.f32 %v1118, %v1614
      %v1616 = vpop.f32.mrf.mxu0
      %1617 = vmatprep.mubr.f32.mxu0 0.0
      %1618 = vmatmul.mubr.f32.gmra.mxu0 %v1266
      %v1619 = vpop.f32.mrf.mxu0
      %v1620 = vadd.f32 %v1118, %v1619
      %v1621 = vpop.f32.mrf.mxu0
      %1622 = vmatprep.mubr.f32.mxu0 0.0
      %1623 = vmatmul.mubr.f32.gmra.mxu0 %v1269
      %v1624 = vpop.f32.mrf.mxu0
      %v1625 = vadd.f32 %v1118, %v1624
      %v1626 = vpop.f32.mrf.mxu0
      %1627 = vmatprep.mubr.f32.mxu0 0.0
      %1628 = vmatmul.mubr.f32.gmra.mxu0 %v1272
      %v1629 = vpop.f32.mrf.mxu0
      %v1630 = vadd.f32 %v1118, %v1629
      %v1631 = vpop.f32.mrf.mxu0
      %1632 = vmatprep.mubr.f32.mxu0 0.0
      %1633 = vmatmul.mubr.f32.gmra.mxu0 %v1275
      %v1634 = vpop.f32.mrf.mxu0
      %v1635 = vadd.f32 %v1118, %v1634
      %v1636 = vpop.f32.mrf.mxu0
      %1637 = vmatprep.mubr.f32.mxu0 0.0
      %1638 = vmatmul.mubr.f32.gmra.mxu0 %v1278
      %v1639 = vpop.f32.mrf.mxu0
      %v1640 = vadd.f32 %v1118, %v1639
      %v1641 = vpop.f32.mrf.mxu0
      %1642 = vmatprep.mubr.f32.mxu0 0.0
      %1643 = vmatmul.mubr.f32.gmra.mxu0 %v1281
      %v1644 = vpop.f32.mrf.mxu0
      %v1645 = vadd.f32 %v1118, %v1644
      %v1646 = vpop.f32.mrf.mxu0
      %1647 = vmatprep.mubr.f32.mxu0 0.0
      %1648 = vmatmul.mubr.f32.gmra.mxu0 %v1284
      %v1649 = vpop.f32.mrf.mxu0
      %v1650 = vadd.f32 %v1118, %v1649
      %v1651 = vpop.f32.mrf.mxu0
      %1652 = vmatprep.mubr.f32.mxu0 0.0
      %1653 = vmatmul.mubr.f32.gmra.mxu0 %v1287
      %v1654 = vpop.f32.mrf.mxu0
      %v1655 = vadd.f32 %v1118, %v1654
      %v1656 = vpop.f32.mrf.mxu0
      %1657 = vmatprep.mubr.f32.mxu0 0.0
      %1658 = vmatmul.mubr.f32.gmra.mxu0 %v1290
      %v1659 = vpop.f32.mrf.mxu0
      %v1660 = vadd.f32 %v1118, %v1659
      %v1661 = vpop.f32.mrf.mxu0
      %1662 = vmatprep.mubr.f32.mxu0 0.0
      %1663 = vmatmul.mubr.f32.gmra.mxu0 %v1293
      %v1664 = vpop.f32.mrf.mxu0
      %v1665 = vadd.f32 %v1118, %v1664
      %v1666 = vpop.f32.mrf.mxu0
      %1667 = vmatprep.mubr.f32.mxu0 0.0
      %1668 = vmatmul.mubr.f32.gmra.mxu0 %v1296
      %v1669 = vpop.f32.mrf.mxu0
      %v1670 = vadd.f32 %v1118, %v1669
      %v1671 = vpop.f32.mrf.mxu0
      %1672 = vmatprep.mubr.f32.mxu0 0.0
      %1673 = vmatmul.mubr.f32.gmra.mxu0 %v1299
      %v1674 = vpop.f32.mrf.mxu0
      %v1675 = vadd.f32 %v1118, %v1674
      %v1676 = vpop.f32.mrf.mxu0
      %1677 = vmatprep.mubr.f32.mxu0 0.0
      %1678 = vmatmul.mubr.f32.gmra.mxu0 %v1302
      %v1679 = vpop.f32.mrf.mxu0
      %v1680 = vadd.f32 %v1118, %v1679
      %v1681 = vpop.f32.mrf.mxu0
      %1682 = vmatprep.mubr.f32.mxu0 0.0
      %1683 = vmatmul.mubr.f32.gmra.mxu0 %v1305
      %v1684 = vpop.f32.mrf.mxu0
      %v1685 = vadd.f32 %v1118, %v1684
      %v1686 = vpop.f32.mrf.mxu0
      %1687 = vmatprep.mubr.f32.mxu0 0.0
      %1688 = vmatmul.mubr.f32.gmra.mxu0 %v1308
      %v1689 = vpop.f32.mrf.mxu0
      %v1690 = vadd.f32 %v1118, %v1689
      %v1691 = vpop.f32.mrf.mxu0
      %1692 = vmatprep.mubr.f32.mxu0 0.0
      %1693 = vmatmul.mubr.f32.gmra.mxu0 %v1311
      %v1694 = vpop.f32.mrf.mxu0
      %v1695 = vadd.f32 %v1118, %v1694
      %v1696 = vpop.f32.mrf.mxu0
      %1697 = vdwg.mxu0
      %v1698 = vmax.f32 %v1380, 0.0
      %v1699 = vmax.f32 %v1385, 0.0
      %v1700 = vmax.f32 %v1390, 0.0
      %v1701 = vmax.f32 %v1395, 0.0
      %v1702 = vmax.f32 %v1400, 0.0
      %v1703 = vmax.f32 %v1405, 0.0
      %v1704 = vmax.f32 %v1410, 0.0
      %v1705 = vmax.f32 %v1415, 0.0
      %v1706 = vmax.f32 %v1420, 0.0
      %v1707 = vmax.f32 %v1425, 0.0
      %v1708 = vmax.f32 %v1430, 0.0
      %v1709 = vmax.f32 %v1435, 0.0
      %v1710 = vmax.f32 %v1440, 0.0
      %v1711 = vmax.f32 %v1445, 0.0
      %v1712 = vmax.f32 %v1450, 0.0
      %v1713 = vmax.f32 %v1455, 0.0
      %v1714 = vmax.f32 %v1460, 0.0
      %v1715 = vmax.f32 %v1465, 0.0
      %v1716 = vmax.f32 %v1470, 0.0
      %v1717 = vmax.f32 %v1475, 0.0
      %v1718 = vmax.f32 %v1480, 0.0
      %v1719 = vmax.f32 %v1485, 0.0
      %v1720 = vmax.f32 %v1490, 0.0
      %v1721 = vmax.f32 %v1495, 0.0
      %v1722 = vmax.f32 %v1500, 0.0
      %v1723 = vmax.f32 %v1505, 0.0
      %v1724 = vmax.f32 %v1510, 0.0
      %v1725 = vmax.f32 %v1515, 0.0
      %v1726 = vmax.f32 %v1520, 0.0
      %v1727 = vmax.f32 %v1525, 0.0
      %v1728 = vmax.f32 %v1530, 0.0
      %v1729 = vmax.f32 %v1535, 0.0
      %v1730 = vmax.f32 %v1540, 0.0
      %v1731 = vmax.f32 %v1545, 0.0
      %v1732 = vmax.f32 %v1550, 0.0
      %v1733 = vmax.f32 %v1555, 0.0
      %v1734 = vmax.f32 %v1560, 0.0
      %v1735 = vmax.f32 %v1565, 0.0
      %v1736 = vmax.f32 %v1570, 0.0
      %v1737 = vmax.f32 %v1575, 0.0
      %v1738 = vmax.f32 %v1580, 0.0
      %v1739 = vmax.f32 %v1585, 0.0
      %v1740 = vmax.f32 %v1590, 0.0
      %v1741 = vmax.f32 %v1595, 0.0
      %v1742 = vmax.f32 %v1600, 0.0
      %v1743 = vmax.f32 %v1605, 0.0
      %v1744 = vmax.f32 %v1610, 0.0
      %v1745 = vmax.f32 %v1615, 0.0
      %v1746 = vmax.f32 %v1620, 0.0
      %v1747 = vmax.f32 %v1625, 0.0
      %v1748 = vmax.f32 %v1630, 0.0
      %v1749 = vmax.f32 %v1635, 0.0
      %v1750 = vmax.f32 %v1640, 0.0
      %v1751 = vmax.f32 %v1645, 0.0
      %v1752 = vmax.f32 %v1650, 0.0
      %v1753 = vmax.f32 %v1655, 0.0
      %v1754 = vmax.f32 %v1660, 0.0
      %v1755 = vmax.f32 %v1665, 0.0
      %v1756 = vmax.f32 %v1670, 0.0
      %v1757 = vmax.f32 %v1675, 0.0
      %v1758 = vmax.f32 %v1680, 0.0
      %v1759 = vmax.f32 %v1685, 0.0
      %v1760 = vmax.f32 %v1690, 0.0
      %v1761 = vmax.f32 %v1695, 0.0
      %v1762 = vld [vmem:[%s5] sm:$0xff]
      %v1763 = vld [vmem:[%s5 + $0x8] sm:$0xff]
      %v1764 = vld [vmem:[%s5 + $0x10] sm:$0xff]
      %v1765 = vld [vmem:[%s5 + $0x18] sm:$0xff]
      %v1766 = vld [vmem:[%s5 + $0x20] sm:$0xff]
      %v1767 = vld [vmem:[%s5 + $0x28] sm:$0xff]
      %v1768 = vld [vmem:[%s5 + $0x30] sm:$0xff]
      %v1769 = vld [vmem:[%s5 + $0x38] sm:$0xff]
      %v1770 = vld [vmem:[%s5 + $0x40] sm:$0xff]
      %v1771 = vld [vmem:[%s5 + $0x48] sm:$0xff]
      %v1772 = vld [vmem:[%s5 + $0x50] sm:$0xff]
      %v1773 = vld [vmem:[%s5 + $0x58] sm:$0xff]
      %v1774 = vld [vmem:[%s5 + $0x60] sm:$0xff]
      %v1775 = vld [vmem:[%s5 + $0x68] sm:$0xff]
      %v1776 = vld [vmem:[%s5 + $0x70] sm:$0xff]
      %v1777 = vld [vmem:[%s5 + $0x78] sm:$0xff]
      %v1778 = vld [vmem:[%s6] sm:$0x1]
      %v1780 = vlaneseq
      %v1781 = vshrl.u32 %v1780, 7
      %v1782 = vsub.s32 0, %v1781
      %v1783 = vrot.slane %v1778, %v1782
      %1785 = vmatprep.subr.mxu0 0.0
      %1786 = vmatpush1.msra.mxu0 %v1777
      %1787 = vmatprep.subr.mxu0 0.0
      %1788 = vmatpush1.msra.mxu0 %v1776
      %1789 = vmatprep.subr.mxu0 0.0
      %1790 = vmatpush1.msra.mxu0 %v1775
      %1791 = vmatprep.subr.mxu0 0.0
      %1792 = vmatpush1.msra.mxu0 %v1774
      %1793 = vmatprep.subr.mxu0 0.0
      %1794 = vmatpush1.msra.mxu0 %v1773
      %1795 = vmatprep.subr.mxu0 0.0
      %1796 = vmatpush1.msra.mxu0 %v1772
      %1797 = vmatprep.subr.mxu0 0.0
      %1798 = vmatpush1.msra.mxu0 %v1771
      %1799 = vmatprep.subr.mxu0 0.0
      %1800 = vmatpush1.msra.mxu0 %v1770
      %1801 = vmatprep.subr.mxu0 0.0
      %1802 = vmatpush1.msra.mxu0 %v1769
      %1803 = vmatprep.subr.mxu0 0.0
      %1804 = vmatpush1.msra.mxu0 %v1768
      %1805 = vmatprep.subr.mxu0 0.0
      %1806 = vmatpush1.msra.mxu0 %v1767
      %1807 = vmatprep.subr.mxu0 0.0
      %1808 = vmatpush1.msra.mxu0 %v1766
      %1809 = vmatprep.subr.mxu0 0.0
      %1810 = vmatpush1.msra.mxu0 %v1765
      %1811 = vmatprep.subr.mxu0 0.0
      %1812 = vmatpush1.msra.mxu0 %v1764
      %1813 = vmatprep.subr.mxu0 0.0
      %1814 = vmatpush1.msra.mxu0 %v1763
      %1815 = vmatprep.subr.mxu0 0.0
      %1816 = vmatpush1.msra.mxu0 %v1762
      %1817 = vmatprep.subr.mxu0 0.0
      %1818 = vmatpush2.msra.mxu0 0.0
      %1819 = vmatprep.subr.mxu0 0.0
      %1820 = vmatpush2.msra.mxu0 0.0
      %1821 = vmatprep.subr.mxu0 0.0
      %1822 = vmatpush2.msra.mxu0 0.0
      %1823 = vmatprep.subr.mxu0 0.0
      %1824 = vmatpush2.msra.mxu0 0.0
      %1825 = vmatprep.subr.mxu0 0.0
      %1826 = vmatpush2.msra.mxu0 0.0
      %1827 = vmatprep.subr.mxu0 0.0
      %1828 = vmatpush2.msra.mxu0 0.0
      %1829 = vmatprep.subr.mxu0 0.0
      %1830 = vmatpush2.msra.mxu0 0.0
      %1831 = vmatprep.subr.mxu0 0.0
      %1832 = vmatpush2.msra.mxu0 0.0
      %1833 = vmatprep.subr.mxu0 0.0
      %1834 = vmatpush2.msra.mxu0 0.0
      %1835 = vmatprep.subr.mxu0 0.0
      %1836 = vmatpush2.msra.mxu0 0.0
      %1837 = vmatprep.subr.mxu0 0.0
      %1838 = vmatpush2.msra.mxu0 0.0
      %1839 = vmatprep.subr.mxu0 0.0
      %1840 = vmatpush2.msra.mxu0 0.0
      %1841 = vmatprep.subr.mxu0 0.0
      %1842 = vmatpush2.msra.mxu0 0.0
      %1843 = vmatprep.subr.mxu0 0.0
      %1844 = vmatpush2.msra.mxu0 0.0
      %1845 = vmatprep.subr.mxu0 0.0
      %1846 = vmatpush2.msra.mxu0 0.0
      %1847 = vmatprep.subr.mxu0 0.0
      %1848 = vmatpush2.msra.mxu0 0.0
      %1849 = vmatprep.mubr.f32.mxu0 0.0
      %1850 = vmatmul.mubr.f32.gmra.mxu0 %v1698
      %v1851 = vpop.f32.mrf.mxu0
      %v1852 = vadd.f32 %v1783, %v1851
      %v1853 = vpop.f32.mrf.mxu0
      %1854 = vmatprep.mubr.f32.mxu0 0.0
      %1855 = vmatmul.mubr.f32.gmra.mxu0 %v1699
      %v1856 = vpop.f32.mrf.mxu0
      %v1857 = vadd.f32 %v1783, %v1856
      %v1858 = vpop.f32.mrf.mxu0
      %1859 = vmatprep.mubr.f32.mxu0 0.0
      %1860 = vmatmul.mubr.f32.gmra.mxu0 %v1700
      %v1861 = vpop.f32.mrf.mxu0
      %v1862 = vadd.f32 %v1783, %v1861
      %v1863 = vpop.f32.mrf.mxu0
      %1864 = vmatprep.mubr.f32.mxu0 0.0
      %1865 = vmatmul.mubr.f32.gmra.mxu0 %v1701
      %v1866 = vpop.f32.mrf.mxu0
      %v1867 = vadd.f32 %v1783, %v1866
      %v1868 = vpop.f32.mrf.mxu0
      %1869 = vmatprep.mubr.f32.mxu0 0.0
      %1870 = vmatmul.mubr.f32.gmra.mxu0 %v1702
      %v1871 = vpop.f32.mrf.mxu0
      %v1872 = vadd.f32 %v1783, %v1871
      %v1873 = vpop.f32.mrf.mxu0
      %1874 = vmatprep.mubr.f32.mxu0 0.0
      %1875 = vmatmul.mubr.f32.gmra.mxu0 %v1703
      %v1876 = vpop.f32.mrf.mxu0
      %v1877 = vadd.f32 %v1783, %v1876
      %v1878 = vpop.f32.mrf.mxu0
      %1879 = vmatprep.mubr.f32.mxu0 0.0
      %1880 = vmatmul.mubr.f32.gmra.mxu0 %v1704
      %v1881 = vpop.f32.mrf.mxu0
      %v1882 = vadd.f32 %v1783, %v1881
      %v1883 = vpop.f32.mrf.mxu0
      %1884 = vmatprep.mubr.f32.mxu0 0.0
      %1885 = vmatmul.mubr.f32.gmra.mxu0 %v1705
      %v1886 = vpop.f32.mrf.mxu0
      %v1887 = vadd.f32 %v1783, %v1886
      %v1888 = vpop.f32.mrf.mxu0
      %1889 = vmatprep.mubr.f32.mxu0 0.0
      %1890 = vmatmul.mubr.f32.gmra.mxu0 %v1706
      %v1891 = vpop.f32.mrf.mxu0
      %v1892 = vadd.f32 %v1783, %v1891
      %v1893 = vpop.f32.mrf.mxu0
      %1894 = vmatprep.mubr.f32.mxu0 0.0
      %1895 = vmatmul.mubr.f32.gmra.mxu0 %v1707
      %v1896 = vpop.f32.mrf.mxu0
      %v1897 = vadd.f32 %v1783, %v1896
      %v1898 = vpop.f32.mrf.mxu0
      %1899 = vmatprep.mubr.f32.mxu0 0.0
      %1900 = vmatmul.mubr.f32.gmra.mxu0 %v1708
      %v1901 = vpop.f32.mrf.mxu0
      %v1902 = vadd.f32 %v1783, %v1901
      %v1903 = vpop.f32.mrf.mxu0
      %1904 = vmatprep.mubr.f32.mxu0 0.0
      %1905 = vmatmul.mubr.f32.gmra.mxu0 %v1709
      %v1906 = vpop.f32.mrf.mxu0
      %v1907 = vadd.f32 %v1783, %v1906
      %v1908 = vpop.f32.mrf.mxu0
      %1909 = vmatprep.mubr.f32.mxu0 0.0
      %1910 = vmatmul.mubr.f32.gmra.mxu0 %v1710
      %v1911 = vpop.f32.mrf.mxu0
      %v1912 = vadd.f32 %v1783, %v1911
      %v1913 = vpop.f32.mrf.mxu0
      %1914 = vmatprep.mubr.f32.mxu0 0.0
      %1915 = vmatmul.mubr.f32.gmra.mxu0 %v1711
      %v1916 = vpop.f32.mrf.mxu0
      %v1917 = vadd.f32 %v1783, %v1916
      %v1918 = vpop.f32.mrf.mxu0
      %1919 = vmatprep.mubr.f32.mxu0 0.0
      %1920 = vmatmul.mubr.f32.gmra.mxu0 %v1712
      %v1921 = vpop.f32.mrf.mxu0
      %v1922 = vadd.f32 %v1783, %v1921
      %v1923 = vpop.f32.mrf.mxu0
      %1924 = vmatprep.mubr.f32.mxu0 0.0
      %1925 = vmatmul.mubr.f32.gmra.mxu0 %v1713
      %v1926 = vpop.f32.mrf.mxu0
      %v1927 = vadd.f32 %v1783, %v1926
      %v1928 = vpop.f32.mrf.mxu0
      %1929 = vmatprep.mubr.f32.mxu0 0.0
      %1930 = vmatmul.mubr.f32.gmra.mxu0 %v1714
      %v1931 = vpop.f32.mrf.mxu0
      %v1932 = vadd.f32 %v1783, %v1931
      %v1933 = vpop.f32.mrf.mxu0
      %1934 = vmatprep.mubr.f32.mxu0 0.0
      %1935 = vmatmul.mubr.f32.gmra.mxu0 %v1715
      %v1936 = vpop.f32.mrf.mxu0
      %v1937 = vadd.f32 %v1783, %v1936
      %v1938 = vpop.f32.mrf.mxu0
      %1939 = vmatprep.mubr.f32.mxu0 0.0
      %1940 = vmatmul.mubr.f32.gmra.mxu0 %v1716
      %v1941 = vpop.f32.mrf.mxu0
      %v1942 = vadd.f32 %v1783, %v1941
      %v1943 = vpop.f32.mrf.mxu0
      %1944 = vmatprep.mubr.f32.mxu0 0.0
      %1945 = vmatmul.mubr.f32.gmra.mxu0 %v1717
      %v1946 = vpop.f32.mrf.mxu0
      %v1947 = vadd.f32 %v1783, %v1946
      %v1948 = vpop.f32.mrf.mxu0
      %1949 = vmatprep.mubr.f32.mxu0 0.0
      %1950 = vmatmul.mubr.f32.gmra.mxu0 %v1718
      %v1951 = vpop.f32.mrf.mxu0
      %v1952 = vadd.f32 %v1783, %v1951
      %v1953 = vpop.f32.mrf.mxu0
      %1954 = vmatprep.mubr.f32.mxu0 0.0
      %1955 = vmatmul.mubr.f32.gmra.mxu0 %v1719
      %v1956 = vpop.f32.mrf.mxu0
      %v1957 = vadd.f32 %v1783, %v1956
      %v1958 = vpop.f32.mrf.mxu0
      %1959 = vmatprep.mubr.f32.mxu0 0.0
      %1960 = vmatmul.mubr.f32.gmra.mxu0 %v1720
      %v1961 = vpop.f32.mrf.mxu0
      %v1962 = vadd.f32 %v1783, %v1961
      %v1963 = vpop.f32.mrf.mxu0
      %1964 = vmatprep.mubr.f32.mxu0 0.0
      %1965 = vmatmul.mubr.f32.gmra.mxu0 %v1721
      %v1966 = vpop.f32.mrf.mxu0
      %v1967 = vadd.f32 %v1783, %v1966
      %v1968 = vpop.f32.mrf.mxu0
      %1969 = vmatprep.mubr.f32.mxu0 0.0
      %1970 = vmatmul.mubr.f32.gmra.mxu0 %v1722
      %v1971 = vpop.f32.mrf.mxu0
      %v1972 = vadd.f32 %v1783, %v1971
      %v1973 = vpop.f32.mrf.mxu0
      %1974 = vmatprep.mubr.f32.mxu0 0.0
      %1975 = vmatmul.mubr.f32.gmra.mxu0 %v1723
      %v1976 = vpop.f32.mrf.mxu0
      %v1977 = vadd.f32 %v1783, %v1976
      %v1978 = vpop.f32.mrf.mxu0
      %1979 = vmatprep.mubr.f32.mxu0 0.0
      %1980 = vmatmul.mubr.f32.gmra.mxu0 %v1724
      %v1981 = vpop.f32.mrf.mxu0
      %v1982 = vadd.f32 %v1783, %v1981
      %v1983 = vpop.f32.mrf.mxu0
      %1984 = vmatprep.mubr.f32.mxu0 0.0
      %1985 = vmatmul.mubr.f32.gmra.mxu0 %v1725
      %v1986 = vpop.f32.mrf.mxu0
      %v1987 = vadd.f32 %v1783, %v1986
      %v1988 = vpop.f32.mrf.mxu0
      %1989 = vmatprep.mubr.f32.mxu0 0.0
      %1990 = vmatmul.mubr.f32.gmra.mxu0 %v1726
      %v1991 = vpop.f32.mrf.mxu0
      %v1992 = vadd.f32 %v1783, %v1991
      %v1993 = vpop.f32.mrf.mxu0
      %1994 = vmatprep.mubr.f32.mxu0 0.0
      %1995 = vmatmul.mubr.f32.gmra.mxu0 %v1727
      %v1996 = vpop.f32.mrf.mxu0
      %v1997 = vadd.f32 %v1783, %v1996
      %v1998 = vpop.f32.mrf.mxu0
      %1999 = vmatprep.mubr.f32.mxu0 0.0
      %2000 = vmatmul.mubr.f32.gmra.mxu0 %v1728
      %v2001 = vpop.f32.mrf.mxu0
      %v2002 = vadd.f32 %v1783, %v2001
      %v2003 = vpop.f32.mrf.mxu0
      %2004 = vmatprep.mubr.f32.mxu0 0.0
      %2005 = vmatmul.mubr.f32.gmra.mxu0 %v1729
      %v2006 = vpop.f32.mrf.mxu0
      %v2007 = vadd.f32 %v1783, %v2006
      %v2008 = vpop.f32.mrf.mxu0
      %2009 = vmatprep.mubr.f32.mxu0 0.0
      %2010 = vmatmul.mubr.f32.gmra.mxu0 %v1730
      %v2011 = vpop.f32.mrf.mxu0
      %v2012 = vadd.f32 %v1783, %v2011
      %v2013 = vpop.f32.mrf.mxu0
      %2014 = vmatprep.mubr.f32.mxu0 0.0
      %2015 = vmatmul.mubr.f32.gmra.mxu0 %v1731
      %v2016 = vpop.f32.mrf.mxu0
      %v2017 = vadd.f32 %v1783, %v2016
      %v2018 = vpop.f32.mrf.mxu0
      %2019 = vmatprep.mubr.f32.mxu0 0.0
      %2020 = vmatmul.mubr.f32.gmra.mxu0 %v1732
      %v2021 = vpop.f32.mrf.mxu0
      %v2022 = vadd.f32 %v1783, %v2021
      %v2023 = vpop.f32.mrf.mxu0
      %2024 = vmatprep.mubr.f32.mxu0 0.0
      %2025 = vmatmul.mubr.f32.gmra.mxu0 %v1733
      %v2026 = vpop.f32.mrf.mxu0
      %v2027 = vadd.f32 %v1783, %v2026
      %v2028 = vpop.f32.mrf.mxu0
      %2029 = vmatprep.mubr.f32.mxu0 0.0
      %2030 = vmatmul.mubr.f32.gmra.mxu0 %v1734
      %v2031 = vpop.f32.mrf.mxu0
      %v2032 = vadd.f32 %v1783, %v2031
      %v2033 = vpop.f32.mrf.mxu0
      %2034 = vmatprep.mubr.f32.mxu0 0.0
      %2035 = vmatmul.mubr.f32.gmra.mxu0 %v1735
      %v2036 = vpop.f32.mrf.mxu0
      %v2037 = vadd.f32 %v1783, %v2036
      %v2038 = vpop.f32.mrf.mxu0
      %2039 = vmatprep.mubr.f32.mxu0 0.0
      %2040 = vmatmul.mubr.f32.gmra.mxu0 %v1736
      %v2041 = vpop.f32.mrf.mxu0
      %v2042 = vadd.f32 %v1783, %v2041
      %v2043 = vpop.f32.mrf.mxu0
      %2044 = vmatprep.mubr.f32.mxu0 0.0
      %2045 = vmatmul.mubr.f32.gmra.mxu0 %v1737
      %v2046 = vpop.f32.mrf.mxu0
      %v2047 = vadd.f32 %v1783, %v2046
      %v2048 = vpop.f32.mrf.mxu0
      %2049 = vmatprep.mubr.f32.mxu0 0.0
      %2050 = vmatmul.mubr.f32.gmra.mxu0 %v1738
      %v2051 = vpop.f32.mrf.mxu0
      %v2052 = vadd.f32 %v1783, %v2051
      %v2053 = vpop.f32.mrf.mxu0
      %2054 = vmatprep.mubr.f32.mxu0 0.0
      %2055 = vmatmul.mubr.f32.gmra.mxu0 %v1739
      %v2056 = vpop.f32.mrf.mxu0
      %v2057 = vadd.f32 %v1783, %v2056
      %v2058 = vpop.f32.mrf.mxu0
      %2059 = vmatprep.mubr.f32.mxu0 0.0
      %2060 = vmatmul.mubr.f32.gmra.mxu0 %v1740
      %v2061 = vpop.f32.mrf.mxu0
      %v2062 = vadd.f32 %v1783, %v2061
      %v2063 = vpop.f32.mrf.mxu0
      %2064 = vmatprep.mubr.f32.mxu0 0.0
      %2065 = vmatmul.mubr.f32.gmra.mxu0 %v1741
      %v2066 = vpop.f32.mrf.mxu0
      %v2067 = vadd.f32 %v1783, %v2066
      %v2068 = vpop.f32.mrf.mxu0
      %2069 = vmatprep.mubr.f32.mxu0 0.0
      %2070 = vmatmul.mubr.f32.gmra.mxu0 %v1742
      %v2071 = vpop.f32.mrf.mxu0
      %v2072 = vadd.f32 %v1783, %v2071
      %v2073 = vpop.f32.mrf.mxu0
      %2074 = vmatprep.mubr.f32.mxu0 0.0
      %2075 = vmatmul.mubr.f32.gmra.mxu0 %v1743
      %v2076 = vpop.f32.mrf.mxu0
      %v2077 = vadd.f32 %v1783, %v2076
      %v2078 = vpop.f32.mrf.mxu0
      %2079 = vmatprep.mubr.f32.mxu0 0.0
      %2080 = vmatmul.mubr.f32.gmra.mxu0 %v1744
      %v2081 = vpop.f32.mrf.mxu0
      %v2082 = vadd.f32 %v1783, %v2081
      %v2083 = vpop.f32.mrf.mxu0
      %2084 = vmatprep.mubr.f32.mxu0 0.0
      %2085 = vmatmul.mubr.f32.gmra.mxu0 %v1745
      %v2086 = vpop.f32.mrf.mxu0
      %v2087 = vadd.f32 %v1783, %v2086
      %v2088 = vpop.f32.mrf.mxu0
      %2089 = vmatprep.mubr.f32.mxu0 0.0
      %2090 = vmatmul.mubr.f32.gmra.mxu0 %v1746
      %v2091 = vpop.f32.mrf.mxu0
      %v2092 = vadd.f32 %v1783, %v2091
      %v2093 = vpop.f32.mrf.mxu0
      %2094 = vmatprep.mubr.f32.mxu0 0.0
      %2095 = vmatmul.mubr.f32.gmra.mxu0 %v1747
      %v2096 = vpop.f32.mrf.mxu0
      %v2097 = vadd.f32 %v1783, %v2096
      %v2098 = vpop.f32.mrf.mxu0
      %2099 = vmatprep.mubr.f32.mxu0 0.0
      %2100 = vmatmul.mubr.f32.gmra.mxu0 %v1748
      %v2101 = vpop.f32.mrf.mxu0
      %v2102 = vadd.f32 %v1783, %v2101
      %v2103 = vpop.f32.mrf.mxu0
      %2104 = vmatprep.mubr.f32.mxu0 0.0
      %2105 = vmatmul.mubr.f32.gmra.mxu0 %v1749
      %v2106 = vpop.f32.mrf.mxu0
      %v2107 = vadd.f32 %v1783, %v2106
      %v2108 = vpop.f32.mrf.mxu0
      %2109 = vmatprep.mubr.f32.mxu0 0.0
      %2110 = vmatmul.mubr.f32.gmra.mxu0 %v1750
      %v2111 = vpop.f32.mrf.mxu0
      %v2112 = vadd.f32 %v1783, %v2111
      %v2113 = vpop.f32.mrf.mxu0
      %2114 = vmatprep.mubr.f32.mxu0 0.0
      %2115 = vmatmul.mubr.f32.gmra.mxu0 %v1751
      %v2116 = vpop.f32.mrf.mxu0
      %v2117 = vadd.f32 %v1783, %v2116
      %v2118 = vpop.f32.mrf.mxu0
      %2119 = vmatprep.mubr.f32.mxu0 0.0
      %2120 = vmatmul.mubr.f32.gmra.mxu0 %v1752
      %v2121 = vpop.f32.mrf.mxu0
      %v2122 = vadd.f32 %v1783, %v2121
      %v2123 = vpop.f32.mrf.mxu0
      %2124 = vmatprep.mubr.f32.mxu0 0.0
      %2125 = vmatmul.mubr.f32.gmra.mxu0 %v1753
      %v2126 = vpop.f32.mrf.mxu0
      %v2127 = vadd.f32 %v1783, %v2126
      %v2128 = vpop.f32.mrf.mxu0
      %2129 = vmatprep.mubr.f32.mxu0 0.0
      %2130 = vmatmul.mubr.f32.gmra.mxu0 %v1754
      %v2131 = vpop.f32.mrf.mxu0
      %v2132 = vadd.f32 %v1783, %v2131
      %v2133 = vpop.f32.mrf.mxu0
      %2134 = vmatprep.mubr.f32.mxu0 0.0
      %2135 = vmatmul.mubr.f32.gmra.mxu0 %v1755
      %v2136 = vpop.f32.mrf.mxu0
      %v2137 = vadd.f32 %v1783, %v2136
      %v2138 = vpop.f32.mrf.mxu0
      %2139 = vmatprep.mubr.f32.mxu0 0.0
      %2140 = vmatmul.mubr.f32.gmra.mxu0 %v1756
      %v2141 = vpop.f32.mrf.mxu0
      %v2142 = vadd.f32 %v1783, %v2141
      %v2143 = vpop.f32.mrf.mxu0
      %2144 = vmatprep.mubr.f32.mxu0 0.0
      %2145 = vmatmul.mubr.f32.gmra.mxu0 %v1757
      %v2146 = vpop.f32.mrf.mxu0
      %v2147 = vadd.f32 %v1783, %v2146
      %v2148 = vpop.f32.mrf.mxu0
      %2149 = vmatprep.mubr.f32.mxu0 0.0
      %2150 = vmatmul.mubr.f32.gmra.mxu0 %v1758
      %v2151 = vpop.f32.mrf.mxu0
      %v2152 = vadd.f32 %v1783, %v2151
      %v2153 = vpop.f32.mrf.mxu0
      %2154 = vmatprep.mubr.f32.mxu0 0.0
      %2155 = vmatmul.mubr.f32.gmra.mxu0 %v1759
      %v2156 = vpop.f32.mrf.mxu0
      %v2157 = vadd.f32 %v1783, %v2156
      %v2158 = vpop.f32.mrf.mxu0
      %2159 = vmatprep.mubr.f32.mxu0 0.0
      %2160 = vmatmul.mubr.f32.gmra.mxu0 %v1760
      %v2161 = vpop.f32.mrf.mxu0
      %v2162 = vadd.f32 %v1783, %v2161
      %v2163 = vpop.f32.mrf.mxu0
      %2164 = vmatprep.mubr.f32.mxu0 0.0
      %2165 = vmatmul.mubr.f32.gmra.mxu0 %v1761
      %v2166 = vpop.f32.mrf.mxu0
      %v2167 = vadd.f32 %v1783, %v2166
      %v2168 = vpop.f32.mrf.mxu0
      %2169 = vdwg.mxu0
      %v2170 = vmax.f32 %v1852, 0.0
      %v2171 = vmax.f32 %v1857, 0.0
      %v2172 = vmax.f32 %v1862, 0.0
      %v2173 = vmax.f32 %v1867, 0.0
      %v2174 = vmax.f32 %v1872, 0.0
      %v2175 = vmax.f32 %v1877, 0.0
      %v2176 = vmax.f32 %v1882, 0.0
      %v2177 = vmax.f32 %v1887, 0.0
      %v2178 = vmax.f32 %v1892, 0.0
      %v2179 = vmax.f32 %v1897, 0.0
      %v2180 = vmax.f32 %v1902, 0.0
      %v2181 = vmax.f32 %v1907, 0.0
      %v2182 = vmax.f32 %v1912, 0.0
      %v2183 = vmax.f32 %v1917, 0.0
      %v2184 = vmax.f32 %v1922, 0.0
      %v2185 = vmax.f32 %v1927, 0.0
      %v2186 = vmax.f32 %v1932, 0.0
      %v2187 = vmax.f32 %v1937, 0.0
      %v2188 = vmax.f32 %v1942, 0.0
      %v2189 = vmax.f32 %v1947, 0.0
      %v2190 = vmax.f32 %v1952, 0.0
      %v2191 = vmax.f32 %v1957, 0.0
      %v2192 = vmax.f32 %v1962, 0.0
      %v2193 = vmax.f32 %v1967, 0.0
      %v2194 = vmax.f32 %v1972, 0.0
      %v2195 = vmax.f32 %v1977, 0.0
      %v2196 = vmax.f32 %v1982, 0.0
      %v2197 = vmax.f32 %v1987, 0.0
      %v2198 = vmax.f32 %v1992, 0.0
      %v2199 = vmax.f32 %v1997, 0.0
      %v2200 = vmax.f32 %v2002, 0.0
      %v2201 = vmax.f32 %v2007, 0.0
      %v2202 = vmax.f32 %v2012, 0.0
      %v2203 = vmax.f32 %v2017, 0.0
      %v2204 = vmax.f32 %v2022, 0.0
      %v2205 = vmax.f32 %v2027, 0.0
      %v2206 = vmax.f32 %v2032, 0.0
      %v2207 = vmax.f32 %v2037, 0.0
      %v2208 = vmax.f32 %v2042, 0.0
      %v2209 = vmax.f32 %v2047, 0.0
      %v2210 = vmax.f32 %v2052, 0.0
      %v2211 = vmax.f32 %v2057, 0.0
      %v2212 = vmax.f32 %v2062, 0.0
      %v2213 = vmax.f32 %v2067, 0.0
      %v2214 = vmax.f32 %v2072, 0.0
      %v2215 = vmax.f32 %v2077, 0.0
      %v2216 = vmax.f32 %v2082, 0.0
      %v2217 = vmax.f32 %v2087, 0.0
      %v2218 = vmax.f32 %v2092, 0.0
      %v2219 = vmax.f32 %v2097, 0.0
      %v2220 = vmax.f32 %v2102, 0.0
      %v2221 = vmax.f32 %v2107, 0.0
      %v2222 = vmax.f32 %v2112, 0.0
      %v2223 = vmax.f32 %v2117, 0.0
      %v2224 = vmax.f32 %v2122, 0.0
      %v2225 = vmax.f32 %v2127, 0.0
      %v2226 = vmax.f32 %v2132, 0.0
      %v2227 = vmax.f32 %v2137, 0.0
      %v2228 = vmax.f32 %v2142, 0.0
      %v2229 = vmax.f32 %v2147, 0.0
      %v2230 = vmax.f32 %v2152, 0.0
      %v2231 = vmax.f32 %v2157, 0.0
      %v2232 = vmax.f32 %v2162, 0.0
      %v2233 = vmax.f32 %v2167, 0.0
      %v2234 = vmax.f32 %v2170, %v2171
      %v2235 = vmax.f32 %v2234, %v2172
      %v2236 = vmax.f32 %v2235, %v2173
      %v2237 = vmax.f32 %v2236, %v2174
      %v2238 = vmax.f32 %v2237, %v2175
      %v2239 = vmax.f32 %v2238, %v2176
      %v2240 = vmax.f32 %v2239, %v2177
      %v2241 = vmax.f32 %v2240, %v2178
      %v2242 = vmax.f32 %v2241, %v2179
      %v2243 = vmax.f32 %v2242, %v2180
      %v2244 = vmax.f32 %v2243, %v2181
      %v2245 = vmax.f32 %v2244, %v2182
      %v2246 = vmax.f32 %v2245, %v2183
      %v2247 = vmax.f32 %v2246, %v2184
      %v2248 = vmax.f32 %v2247, %v2185
      %v2249 = vrot.slane %v2248, 4
      %v2250 = vmax.f32 %v2248, %v2249
      %v2251 = vrot.slane %v2250, 2
      %v2252 = vmax.f32 %v2250, %v2251
      %v2253 = vrot.slane %v2252, 1
      %v2254 = vmax.f32 %v2252, %v2253
      %v2255 = vmax.f32 %v2186, %v2187
      %v2256 = vmax.f32 %v2255, %v2188
      %v2257 = vmax.f32 %v2256, %v2189
      %v2258 = vmax.f32 %v2257, %v2190
      %v2259 = vmax.f32 %v2258, %v2191
      %v2260 = vmax.f32 %v2259, %v2192
      %v2261 = vmax.f32 %v2260, %v2193
      %v2262 = vmax.f32 %v2261, %v2194
      %v2263 = vmax.f32 %v2262, %v2195
      %v2264 = vmax.f32 %v2263, %v2196
      %v2265 = vmax.f32 %v2264, %v2197
      %v2266 = vmax.f32 %v2265, %v2198
      %v2267 = vmax.f32 %v2266, %v2199
      %v2268 = vmax.f32 %v2267, %v2200
      %v2269 = vmax.f32 %v2268, %v2201
      %v2270 = vrot.slane %v2269, 4
      %v2271 = vmax.f32 %v2269, %v2270
      %v2272 = vrot.slane %v2271, 2
      %v2273 = vmax.f32 %v2271, %v2272
      %v2274 = vrot.slane %v2273, 1
      %v2275 = vmax.f32 %v2273, %v2274
      %v2276 = vmax.f32 %v2202, %v2203
      %v2277 = vmax.f32 %v2276, %v2204
      %v2278 = vmax.f32 %v2277, %v2205
      %v2279 = vmax.f32 %v2278, %v2206
      %v2280 = vmax.f32 %v2279, %v2207
      %v2281 = vmax.f32 %v2280, %v2208
      %v2282 = vmax.f32 %v2281, %v2209
      %v2283 = vmax.f32 %v2282, %v2210
      %v2284 = vmax.f32 %v2283, %v2211
      %v2285 = vmax.f32 %v2284, %v2212
      %v2286 = vmax.f32 %v2285, %v2213
      %v2287 = vmax.f32 %v2286, %v2214
      %v2288 = vmax.f32 %v2287, %v2215
      %v2289 = vmax.f32 %v2288, %v2216
      %v2290 = vmax.f32 %v2289, %v2217
      %v2291 = vrot.slane %v2290, 4
      %v2292 = vmax.f32 %v2290, %v2291
      %v2293 = vrot.slane %v2292, 2
      %v2294 = vmax.f32 %v2292, %v2293
      %v2295 = vrot.slane %v2294, 1
      %v2296 = vmax.f32 %v2294, %v2295
      %v2297 = vmax.f32 %v2218, %v2219
      %v2298 = vmax.f32 %v2297, %v2220
      %v2299 = vmax.f32 %v2298, %v2221
      %v2300 = vmax.f32 %v2299, %v2222
      %v2301 = vmax.f32 %v2300, %v2223
      %v2302 = vmax.f32 %v2301, %v2224
      %v2303 = vmax.f32 %v2302, %v2225
      %v2304 = vmax.f32 %v2303, %v2226
      %v2305 = vmax.f32 %v2304, %v2227
      %v2306 = vmax.f32 %v2305, %v2228
      %v2307 = vmax.f32 %v2306, %v2229
      %v2308 = vmax.f32 %v2307, %v2230
      %v2309 = vmax.f32 %v2308, %v2231
      %v2310 = vmax.f32 %v2309, %v2232
      %v2311 = vmax.f32 %v2310, %v2233
      %v2312 = vrot.slane %v2311, 4
      %v2313 = vmax.f32 %v2311, %v2312
      %v2314 = vrot.slane %v2313, 2
      %v2315 = vmax.f32 %v2313, %v2314
      %v2316 = vrot.slane %v2315, 1
      %v2317 = vmax.f32 %v2315, %v2316
      %v2318 = vmax.f32 %v2254, %v2275
      %v2319 = vmax.f32 %v2296, %v2317
      %v2320 = vmax.f32 %v2318, %v2319
      %v2321 = vsub.f32 %v2254, %v2320
      %v2322 = vsub.f32 %v2275, %v2320
      %v2323 = vsub.f32 %v2296, %v2320
      %v2324 = vsub.f32 %v2317, %v2320
      %v2325 = vld [vmem:[%s7] sm:$0xff]
      %v2326 = vld [vmem:[%s7 + $0x8] sm:$0xff]
      %v2327 = vld [vmem:[%s7 + $0x10] sm:$0xff]
      %v2328 = vld [vmem:[%s7 + $0x18] sm:$0xff]
      %v2329 = vld [vmem:[%s7 + $0x20] sm:$0xff]
      %v2330 = vld [vmem:[%s7 + $0x28] sm:$0xff]
      %v2331 = vld [vmem:[%s7 + $0x30] sm:$0xff]
      %v2332 = vld [vmem:[%s7 + $0x38] sm:$0xff]
      %v2333 = vld [vmem:[%s7 + $0x40] sm:$0xff]
      %v2334 = vld [vmem:[%s7 + $0x48] sm:$0xff]
      %v2335 = vld [vmem:[%s7 + $0x50] sm:$0xff]
      %v2336 = vld [vmem:[%s7 + $0x58] sm:$0xff]
      %v2337 = vld [vmem:[%s7 + $0x60] sm:$0xff]
      %v2338 = vld [vmem:[%s7 + $0x68] sm:$0xff]
      %v2339 = vld [vmem:[%s7 + $0x70] sm:$0xff]
      %v2340 = vld [vmem:[%s7 + $0x78] sm:$0xff]
      %v2341 = vld [vmem:[%s8] sm:$0x1]
      %v2343 = vlaneseq
      %v2344 = vshrl.u32 %v2343, 7
      %v2345 = vsub.s32 0, %v2344
      %v2346 = vrot.slane %v2341, %v2345
      %v2352 = vrot.slane %v2322, 7
      %vm2353 = vcmask 1041409
      %v2354 = vsel %vm2353, %v2352, %v2321
      %v2355 = vrot.slane %v2323, 6
      %vm2356 = vcmask 1042434
      %v2357 = vsel %vm2356, %v2355, %v2354
      %v2358 = vrot.slane %v2324, 5
      %vm2359 = vcmask 1043459
      %v2360 = vsel %vm2359, %v2358, %v2357
      %2362 = vmatprep.subr.mxu0 0.0
      %2363 = vmatpush1.msra.mxu0 %v2340
      %2364 = vmatprep.subr.mxu0 0.0
      %2365 = vmatpush1.msra.mxu0 %v2339
      %2366 = vmatprep.subr.mxu0 0.0
      %2367 = vmatpush1.msra.mxu0 %v2338
      %2368 = vmatprep.subr.mxu0 0.0
      %2369 = vmatpush1.msra.mxu0 %v2337
      %2370 = vmatprep.subr.mxu0 0.0
      %2371 = vmatpush1.msra.mxu0 %v2336
      %2372 = vmatprep.subr.mxu0 0.0
      %2373 = vmatpush1.msra.mxu0 %v2335
      %2374 = vmatprep.subr.mxu0 0.0
      %2375 = vmatpush1.msra.mxu0 %v2334
      %2376 = vmatprep.subr.mxu0 0.0
      %2377 = vmatpush1.msra.mxu0 %v2333
      %2378 = vmatprep.subr.mxu0 0.0
      %2379 = vmatpush1.msra.mxu0 %v2332
      %2380 = vmatprep.subr.mxu0 0.0
      %2381 = vmatpush1.msra.mxu0 %v2331
      %2382 = vmatprep.subr.mxu0 0.0
      %2383 = vmatpush1.msra.mxu0 %v2330
      %2384 = vmatprep.subr.mxu0 0.0
      %2385 = vmatpush1.msra.mxu0 %v2329
      %2386 = vmatprep.subr.mxu0 0.0
      %2387 = vmatpush1.msra.mxu0 %v2328
      %2388 = vmatprep.subr.mxu0 0.0
      %2389 = vmatpush1.msra.mxu0 %v2327
      %2390 = vmatprep.subr.mxu0 0.0
      %2391 = vmatpush1.msra.mxu0 %v2326
      %2392 = vmatprep.subr.mxu0 0.0
      %2393 = vmatpush1.msra.mxu0 %v2325
      %2394 = vmatprep.subr.mxu0 0.0
      %2395 = vmatpush2.msra.mxu0 0.0
      %2396 = vmatprep.subr.mxu0 0.0
      %2397 = vmatpush2.msra.mxu0 0.0
      %2398 = vmatprep.subr.mxu0 0.0
      %2399 = vmatpush2.msra.mxu0 0.0
      %2400 = vmatprep.subr.mxu0 0.0
      %2401 = vmatpush2.msra.mxu0 0.0
      %2402 = vmatprep.subr.mxu0 0.0
      %2403 = vmatpush2.msra.mxu0 0.0
      %2404 = vmatprep.subr.mxu0 0.0
      %2405 = vmatpush2.msra.mxu0 0.0
      %2406 = vmatprep.subr.mxu0 0.0
      %2407 = vmatpush2.msra.mxu0 0.0
      %2408 = vmatprep.subr.mxu0 0.0
      %2409 = vmatpush2.msra.mxu0 0.0
      %2410 = vmatprep.subr.mxu0 0.0
      %2411 = vmatpush2.msra.mxu0 0.0
      %2412 = vmatprep.subr.mxu0 0.0
      %2413 = vmatpush2.msra.mxu0 0.0
      %2414 = vmatprep.subr.mxu0 0.0
      %2415 = vmatpush2.msra.mxu0 0.0
      %2416 = vmatprep.subr.mxu0 0.0
      %2417 = vmatpush2.msra.mxu0 0.0
      %2418 = vmatprep.subr.mxu0 0.0
      %2419 = vmatpush2.msra.mxu0 0.0
      %2420 = vmatprep.subr.mxu0 0.0
      %2421 = vmatpush2.msra.mxu0 0.0
      %2422 = vmatprep.subr.mxu0 0.0
      %2423 = vmatpush2.msra.mxu0 0.0
      %2424 = vmatprep.subr.mxu0 0.0
      %2425 = vmatpush2.msra.mxu0 0.0
      %2426 = vmatprep.mubr.f32.mxu0 0.0
      %2427 = vmatmul.mubr.f32.gmra.mxu0 %v2360
      %v2428 = vpop.f32.mrf.mxu0
      %v2429 = vadd.f32 %v2346, %v2428
      %v2430 = vpop.f32.mrf.mxu0
      %2431 = vdwg.mxu0
      %v2432 = vmax.f32 %v2429, 0.0
      %v2433 = vld [vmem:[%s9] sm:$0x1]
      %v2434 = vld [vmem:[#allocation2] sm:$0x1]
      %vm2435 = vcmask 1043456
      %v2436 = vsel %vm2435, %v2432, -inf
      %v2437 = vrot.slane %v2436, 4
      %v2438 = vmax.f32 %v2436, %v2437
      %v2439 = vrot.slane %v2438, 2
      %v2440 = vmax.f32 %v2438, %v2439
      %v2441 = vrot.slane %v2440, 1
      %v2442 = vmax.f32 %v2440, %v2441
      %v2443 = vsub.f32 %v2432, %v2442
      %v2445 = vlaneseq
      %v2446 = vshrl.u32 %v2445, 7
      %v2447 = vsub.s32 0, %v2446
      %v2448 = vrot.slane %v2433, %v2447
      %v2450 = vmul.f32 %v2443, %v2448
      %v2451 = vsel %vm2435, %v2450, 0.0
      %2452 = vadd.xlane.f32.xlu0 %v2451
      %v2453 = vpop.xlane.xlu0 %2452
      %v2455 = vlaneseq
      %v2456 = vshrl.u32 %v2455, 7
      %v2457 = vsub.s32 0, %v2456
      %v2458 = vrot.slane %v2434, %v2457
      %v2460 = vadd.f32 %v2453, %v2458
      %vm2461 = vcmask 3072
      %v2462 = vsel %vm2461, %v2460, -inf
      %v2463 = vrot.slane %v2462, 4
      %v2464 = vmax.f32 %v2462, %v2463
      %v2465 = vrot.slane %v2464, 2
      %v2466 = vmax.f32 %v2464, %v2465
      %v2467 = vrot.slane %v2466, 1
      %v2468 = vmax.f32 %v2466, %v2467
      %v2469 = vsub.f32 %v2460, %v2468
      %v2470 = vmul.f32 %v2469, 1.442695
      %v2471 = vpow.pop %v2470
      %v2472 = vsel %vm2461, %v2471, 0.0
      %v2473 = vrot.slane %v2472, 4
      %v2474 = vadd.f32 %v2472, %v2473
      %v2475 = vrot.slane %v2474, 2
      %v2476 = vadd.f32 %v2474, %v2475
      %v2477 = vrot.slane %v2476, 1
      %v2478 = vadd.f32 %v2476, %v2477
      %v2479 = vlog2.pop %v2478
      %v2480 = vmul.f32 %v2479, 0.6931472
      %v2481 = vsub.f32 %v2469, %v2480
      %2482 = vst.msk [vmem:[%s386] sm:$0xf] %vm2461, %v2481
      %p2483 = scmp.lt.s32.totalorder %s24, 1
      %s2484 = scalar_select %p2483, %s24, 1
      %s2485 = smul.addr %s2484, 4
      %s2486 = scalar_lea.vmem %s11, %s2485
      // Predicated region
      $region65: #{tpu_custom_call.1} parent=63 // pred_check
        %p2487 = pneg %p278
      $region66: #{tpu_custom_call.1} parent=63 // pred_check_branch
        %2489 = sbr.rel (%p2487) target = $region68
      $region67: #{tpu_custom_call.1} parent=63 // pred_region
        _
      $region68: #{tpu_custom_call.1} parent=63 // pred_fallthru
        _
    $region64: #{tpu_custom_call.1} parent=5 // pred_fallthru
      _
    %p2490 = scmp.le.s32.totalorder 2, %s19
    // Predicated region
    $region69: #{tpu_custom_call.1} parent=5 // pred_check
      %p2491 = pneg %p2490
    $region70: #{tpu_custom_call.1} parent=5 // pred_check_branch
      %2493 = sbr.rel (%p2491) target = $region72
    $region71: #{tpu_custom_call.1} parent=5 // pred_region
      %s2494 = ssub.s32 %s19, 2
      // Predicated region
      $region73: #{tpu_custom_call.1} parent=71 // pred_check
        %p2495 = pneg %p284
      $region74: #{tpu_custom_call.1} parent=71 // pred_check_branch
        %2497 = sbr.rel (%p2495) target = $region76
      $region75: #{tpu_custom_call.1} parent=71 // pred_region
        %p2498 = scmp.lt.s32.totalorder %s25, 1
        %s2499 = scalar_select %p2498, %s25, 1
        %s2500 = smul.addr %s2499, 4
        %s2501 = scalar_lea.vmem %s11, %s2500
      $region76: #{tpu_custom_call.1} parent=71 // pred_fallthru
        _
    $region72: #{tpu_custom_call.1} parent=5 // pred_fallthru
      _
  $region6: #{tpu_custom_call.1} parent=0 // loop_footer
    %s23 = sadd.s32 1, %s19
  $region7: #{tpu_custom_call.1} parent=0 // loop_footer_branch
    %18 = sbr.rel target = $region3
  $region8: #{tpu_custom_call.1} parent=0 // loop_exit
    _

</llo_original>
